<compile_context>
chip_gen: v7x
topology: tpu7x:2x2x1
jax: 0.10.0
libtpu: 0.0.40
codegen_flags: <defaults>
</compile_context>

<pallas_src>
import functools

import jax
import jax.numpy as jnp
from jax.experimental import pallas as pl
from jax.experimental.pallas import tpu as pltpu


_FMA_MAX_K = 32  # below this contraction depth, the MXU is <2% utilized


def _gelu_exact(x):
    """Exact (erf-based) GELU, matching nn.GELU() default.

    erf via Abramowitz & Stegun 7.1.26 (|error| <= 1.5e-7).  Reorganized so
    that (a) the divide goes to the EUP (pl.reciprocal, exact) and (b) the
    0.5*x factor is folded:
        g = 0.5 * x * poly(t) * exp(-z^2)
        gelu = x - g   (x >= 0)    |    g   (x < 0)
    """
    z = jnp.abs(x) * 0.7071067811865476
    t = pl.reciprocal(1.0 + 0.3275911 * z, approx=False)
    poly = t * (0.254829592
                + t * (-0.284496736
                       + t * (1.421413741
                              + t * (-1.453152027
                                     + t * 1.061405429))))
    g = (0.5 * x) * poly * jnp.exp(-z * z)
    return jnp.where(x >= 0.0, x - g, g)


def _channel_contract(w, xmat, bias):
    """out[m, l] = sum_k w[m, k] * xmat[k, l] + bias[m, 0].

    For tiny contraction depth K the MXU is latency-bound and nearly empty,
    so unroll into K VPU broadcast-FMAs on the lane-dense HW axis; keep the
    MXU path for production-sized K.
    """
    M, K = w.shape
    if K <= _FMA_MAX_K:
        out = w[:, 0:1] * xmat[0:1, :]
        for k in range(1, K):
            out = out + w[:, k:k + 1] * xmat[k:k + 1, :]
        return out + bias
    return jnp.dot(w, xmat, preferred_element_type=jnp.float32) + bias


def _mlp_kernel(x_ref, w1_ref, b1_ref, wp_ref, bp_ref, w2_ref, b2_ref, o_ref,
                *, H, W, Bb):
    HW = H * W

    w1 = w1_ref[...].astype(jnp.float32)        # (D, Cin)
    b1 = b1_ref[...].astype(jnp.float32)        # (D, 1)
    wp = wp_ref[...].astype(jnp.float32)        # (D, 9)
    bp = bp_ref[...].astype(jnp.float32)        # (D, 1)
    w2 = w2_ref[...].astype(jnp.float32)        # (Cout, D)
    b2 = b2_ref[...].astype(jnp.float32)        # (Cout, 1)

    # ---- loop-invariant boundary masks from one (1, HW) iota (hoisted) ----
    lane = jax.lax.broadcasted_iota(jnp.int32, (1, HW), 1)
    if W & (W - 1) == 0:                         # W is a power of two
        col = lane & (W - 1)
        row = lane >> (int(W).bit_length() - 1)
    else:
        col = lane % W
        row = lane // W
    col_ok = {-1: col >= 1, 1: col < (W - 1)}
    row_ok = {-1: row >= 1, 1: row < (H - 1)}

    tap_mask = {}
    for kh in (-1, 0, 1):
        for kw in (-1, 0, 1):
            m = None
            if kw != 0:
                m = col_ok[kw]
            if kh != 0:
                m = row_ok[kh] if m is None else jnp.logical_and(m, row_ok[kh])
            tap_mask[(kh, kw)] = m               # None => center tap, no mask

    # ---- per-batch processing (Bb is small and static) ----
    for b in range(Bb):
        x = x_ref[b].astype(jnp.float32)         # (Cin, HW)  lanes = HW (dense)

        # fc1 (1x1 conv, K = Cin) + exact GELU
        h = _channel_contract(w1, x, b1)         # (D, HW)
        a = _gelu_exact(h)

        # Depthwise 3x3 conv with zero padding=1, on the flattened HW axis:
        # each tap is an XLU roll (wrap) + boundary mask + VPU FMA.  The roll
        # wraps instead of zero-filling, so kh=+-1 taps carry a row-validity
        # mask in addition to the column masks.
        acc = wp[:, 4:5] * a                     # center tap (kh=0, kw=0)
        for kh in (-1, 0, 1):
            for kw in (-1, 0, 1):
                if kh == 0 and kw == 0:
                    continue
                k = (kh + 1) * 3 + (kw + 1)
                s = kh * W + kw                  # read a[l + s]
                sh = pltpu.roll(a, shift=(-s) % HW, axis=1)
                sh = jnp.where(tap_mask[(kh, kw)], sh, 0.0)
                acc = acc + wp[:, k:k + 1] * sh
        p = acc + bp

        # residual with exact GELU
        a2 = a + _gelu_exact(p)

        # fc2 (1x1 conv, K = D)
        out = _channel_contract(w2, a2, b2)      # (Cout, HW)
        o_ref[b] = out.astype(o_ref.dtype)


# ---------------------------------------------------------------------------
# Host-side sizing helpers
# ---------------------------------------------------------------------------

def _physical_vmem_bytes():
    # 64 MiB per TensorCore on v7x, 128 MiB on v5e/v6e.  Conservative default.
    try:
        return int(pltpu.get_tpu_info().vmem_capacity_bytes)
    except Exception:
        return 64 << 20


def _vmem_demand_bytes(Bb, Cin, D, Cout, HW):
    f32 = 4
    io = 2 * Bb * (Cin + Cout) * HW * f32        # double-buffered in/out blocks
    act = 6 * D * HW * f32                       # live f32 activations per batch
    weights = 2 * (D * Cin + D * 9 + Cout * D + 2 * D + Cout) * f32
    return io + act + weights


def _vmem_limit_bytes(Bb, Cin, D, Cout, HW):
    # Demand-derived limit (2x working set + 8 MiB Mosaic scratch headroom),
    # floored at the default scoped limit and clamped to 75% of physical VMEM.
    demand = _vmem_demand_bytes(Bb, Cin, D, Cout, HW)
    limit = 2 * demand + (8 << 20)
    limit = max(limit, 32 << 20)
    return min(limit, _physical_vmem_bytes() * 3 // 4)


def _pick_batches_per_step(B, Cin, D, Cout, HW, *, target_lanes=2048):
    """Largest per-step batch block that (a) keeps >= 2 grid steps when B >= 2
    (megacore balance on v7x), (b) fits a v7x-sized VMEM budget, stopping once
    each step carries >= target_lanes of lane-dense work."""
    budget = _physical_vmem_bytes() // 2
    best = 1
    for bb in range(1, B + 1):
        if B % bb:
            continue
        steps = B // bb
        if B >= 2 and steps < 2:
            break
        if _vmem_demand_bytes(bb, Cin, D, Cout, HW) > budget:
            break
        best = bb
        if bb * HW >= target_lanes:
            break
    return best


# ---------------------------------------------------------------------------
# Public entry point
# ---------------------------------------------------------------------------

def mlp_pallas(x, w1, b1, wp, bp, w2, b2, *, batches_per_step=None):
    """Fused MLP forward. x: (B, dim, H, W) NCHW, same layout as PyTorch."""
    B, Cin, H, W = x.shape
    D = w1.shape[0]
    Cout = w2.shape[0]
    HW = H * W

    # Free (contiguous) reshape: flattened spatial axis on lanes, NCHW kept.
    x2 = x.reshape(B, Cin, HW)
    w1_2 = w1.reshape(D, Cin)
    b1_2 = b1.reshape(D, 1)
    wp_2 = wp.reshape(D, 9)
    bp_2 = bp.reshape(D, 1)
    w2_2 = w2.reshape(Cout, D)
    b2_2 = b2.reshape(Cout, 1)

    if batches_per_step is None:
        batches_per_step = _pick_batches_per_step(B, Cin, D, Cout, HW)
    Bb = batches_per_step
    assert B % Bb == 0, (B, Bb)
    steps = B // Bb

    kernel = functools.partial(_mlp_kernel, H=H, W=W, Bb=Bb)
    out = pl.pallas_call(
        kernel,
        out_shape=jax.ShapeDtypeStruct((B, Cout, HW), x.dtype),
        grid_spec=pltpu.PrefetchScalarGridSpec(
            num_scalar_prefetch=0,
            grid=(steps,),
            in_specs=[
                pl.BlockSpec((Bb, Cin, HW), lambda g: (g, 0, 0)),
                pl.BlockSpec((D, Cin), lambda g: (0, 0)),
                pl.BlockSpec((D, 1), lambda g: (0, 0)),
                pl.BlockSpec((D, 9), lambda g: (0, 0)),
                pl.BlockSpec((D, 1), lambda g: (0, 0)),
                pl.BlockSpec((Cout, D), lambda g: (0, 0)),
                pl.BlockSpec((Cout, 1), lambda g: (0, 0)),
            ],
            out_specs=pl.BlockSpec((Bb, Cout, HW), lambda g: (g, 0, 0)),
        ),
        compiler_params=pltpu.CompilerParams(
            dimension_semantics=("parallel",),
            vmem_limit_bytes=_vmem_limit_bytes(Bb, Cin, D, Cout, HW),
        ),
    )(x2, w1_2, b1_2, wp_2, bp_2, w2_2, b2_2)
    return out.reshape(B, Cout, H, W)


class MLPPallas:
    """JAX/Pallas equivalent of the PyTorch MLP module (NCHW input)."""

    def __init__(self, dim, mlp_ratio=4, *, key=None, dtype=jnp.float32):
        if key is None:
            key = jax.random.PRNGKey(0)
        D = dim * mlp_ratio
        ks = jax.random.split(key, 6)

        def uniform(kk, shape, bound):
            return jax.random.uniform(kk, shape, dtype, minval=-bound, maxval=bound)

        # PyTorch Conv2d default init: U(-1/sqrt(fan_in), 1/sqrt(fan_in)).
        b_fc1 = 1.0 / (dim ** 0.5)   # fan_in = dim * 1 * 1
        b_pos = 1.0 / 3.0            # fan_in = (D/groups) * 3 * 3 = 9
        b_fc2 = 1.0 / (D ** 0.5)     # fan_in = D * 1 * 1

        self.dim = dim
        self.hidden = D
        self.w1 = uniform(ks[0], (D, dim), b_fc1)   # fc1.weight (D, dim, 1, 1)
        self.b1 = uniform(ks[1], (D,), b_fc1)
        self.wp = uniform(ks[2], (D, 3, 3), b_pos)  # pos.weight (D, 1, 3, 3)
        self.bp = uniform(ks[3], (D,), b_pos)
        self.w2 = uniform(ks[4], (dim, D), b_fc2)   # fc2.weight (dim, D, 1, 1)
        self.b2 = uniform(ks[5], (dim,), b_fc2)

    def __call__(self, x):
        return mlp_pallas(x, self.w1, self.b1, self.wp, self.bp, self.w2, self.b2)


def _reference_mlp(x, m):
    """Pure-JAX reference of the PyTorch forward (exact erf GELU)."""
    hp = jax.lax.Precision.HIGHEST
    h = jnp.einsum('oc,bchw->bohw', m.w1, x, precision=hp) \
        + m.b1[None, :, None, None]
    a = jax.nn.gelu(h, approximate=False)
    p = jax.lax.conv_general_dilated(
        a, m.wp.reshape(m.hidden, 1, 3, 3),
        window_strides=(1, 1), padding=((1, 1), (1, 1)),
        dimension_numbers=('NCHW', 'OIHW', 'NCHW'),
        feature_group_count=m.hidden, precision=hp) \
        + m.bp[None, :, None, None]
    a = a + jax.nn.gelu(p, approximate=False)
    out = jnp.einsum('oc,bchw->bohw', m.w2, a, precision=hp) \
        + m.b2[None, :, None, None]
    return out


if __name__ == "__main__":
    key = jax.random.PRNGKey(0)
    kx, kp = jax.random.split(key)

    B, dim, H, W = 2, 4, 16, 16            # hidden = dim * 4 = 16
    x = jax.random.normal(kx, (B, dim, H, W), dtype=jnp.float32)

    mlp = MLPPallas(dim, mlp_ratio=4, key=kp)
    y = jax.block_until_ready(mlp(x))

    ref = _reference_mlp(x, mlp)
    assert y.shape == (B, dim, H, W)
    err = float(jnp.max(jnp.abs(y - ref)))
    assert jnp.allclose(y, ref, atol=1e-4, rtol=1e-4), err

    print("KERNEL_OK")
</pallas_src>

<mosaic_0001>
module attributes {stable_mosaic.version = 11 : i64} {
  func.func @_mlp_kernel(%arg0: i32, %arg1: memref<1x4x256xf32, #tpu.memory_space<vmem>>, %arg2: memref<16x4xf32, #tpu.memory_space<vmem>>, %arg3: memref<16x1xf32, #tpu.memory_space<vmem>>, %arg4: memref<16x9xf32, #tpu.memory_space<vmem>>, %arg5: memref<16x1xf32, #tpu.memory_space<vmem>>, %arg6: memref<4x16xf32, #tpu.memory_space<vmem>>, %arg7: memref<4x1xf32, #tpu.memory_space<vmem>>, %arg8: memref<1x4x256xf32, #tpu.memory_space<vmem>>) attributes {dimension_semantics = [#tpu.dimension_semantics<parallel>], iteration_bounds = array<i64: 2>, scalar_prefetch = 0 : i64, scratch_operands = 0 : i64, tpu.core_type = #tpu.core_type<tc>, window_params = [{transform_indices = @transform_0, window_bounds = array<i64: 1, 4, 256>}, {pipeline_mode = #tpu.pipeline_mode<synchronous>, transform_indices = @transform_1, window_bounds = array<i64: 16, 4>}, {pipeline_mode = #tpu.pipeline_mode<synchronous>, transform_indices = @transform_2, window_bounds = array<i64: 16, 1>}, {pipeline_mode = #tpu.pipeline_mode<synchronous>, transform_indices = @transform_3, window_bounds = array<i64: 16, 9>}, {pipeline_mode = #tpu.pipeline_mode<synchronous>, transform_indices = @transform_4, window_bounds = array<i64: 16, 1>}, {pipeline_mode = #tpu.pipeline_mode<synchronous>, transform_indices = @transform_5, window_bounds = array<i64: 4, 16>}, {pipeline_mode = #tpu.pipeline_mode<synchronous>, transform_indices = @transform_6, window_bounds = array<i64: 4, 1>}, {transform_indices = @transform_7, window_bounds = array<i64: 1, 4, 256>}]} {
    %c0 = arith.constant 0 : index
    %c0_0 = arith.constant 0 : index
    %0 = vector.load %arg2[%c0, %c0_0] : memref<16x4xf32, #tpu.memory_space<vmem>>, vector<16x4xf32>
    %c0_1 = arith.constant 0 : index
    %c0_2 = arith.constant 0 : index
    %1 = vector.load %arg3[%c0_1, %c0_2] : memref<16x1xf32, #tpu.memory_space<vmem>>, vector<16x1xf32>
    %c0_3 = arith.constant 0 : index
    %c0_4 = arith.constant 0 : index
    %2 = vector.load %arg4[%c0_3, %c0_4] : memref<16x9xf32, #tpu.memory_space<vmem>>, vector<16x9xf32>
    %c0_5 = arith.constant 0 : index
    %c0_6 = arith.constant 0 : index
    %3 = vector.load %arg5[%c0_5, %c0_6] : memref<16x1xf32, #tpu.memory_space<vmem>>, vector<16x1xf32>
    %c0_7 = arith.constant 0 : index
    %c0_8 = arith.constant 0 : index
    %4 = vector.load %arg6[%c0_7, %c0_8] : memref<4x16xf32, #tpu.memory_space<vmem>>, vector<4x16xf32>
    %c0_9 = arith.constant 0 : index
    %c0_10 = arith.constant 0 : index
    %5 = vector.load %arg7[%c0_9, %c0_10] : memref<4x1xf32, #tpu.memory_space<vmem>>, vector<4x1xf32>
    %6 = tpu.iota {dimensions = array<i32: 1>} : vector<1x256xi32>
    %c15_i32 = arith.constant 15 : i32
    %7 = vector.broadcast %c15_i32 : i32 to vector<1x256xi32>
    %8 = arith.andi %6, %7 : vector<1x256xi32>
    %c4_i32 = arith.constant 4 : i32
    %9 = vector.broadcast %c4_i32 : i32 to vector<1x256xi32>
    %10 = arith.shrsi %6, %9 : vector<1x256xi32>
    %c1_i32 = arith.constant 1 : i32
    %11 = vector.broadcast %c1_i32 : i32 to vector<1x256xi32>
    %12 = arith.cmpi sge, %8, %11 : vector<1x256xi32>
    %c15_i32_11 = arith.constant 15 : i32
    %13 = vector.broadcast %c15_i32_11 : i32 to vector<1x256xi32>
    %14 = arith.cmpi slt, %8, %13 : vector<1x256xi32>
    %c1_i32_12 = arith.constant 1 : i32
    %15 = vector.broadcast %c1_i32_12 : i32 to vector<1x256xi32>
    %16 = arith.cmpi sge, %10, %15 : vector<1x256xi32>
    %c15_i32_13 = arith.constant 15 : i32
    %17 = vector.broadcast %c15_i32_13 : i32 to vector<1x256xi32>
    %18 = arith.cmpi slt, %10, %17 : vector<1x256xi32>
    %19 = arith.andi %12, %16 : vector<1x256xi1>
    %20 = arith.andi %14, %16 : vector<1x256xi1>
    %21 = arith.andi %12, %18 : vector<1x256xi1>
    %22 = arith.andi %14, %18 : vector<1x256xi1>
    %c0_14 = arith.constant 0 : index
    %c0_15 = arith.constant 0 : index
    %c0_16 = arith.constant 0 : index
    %23 = vector.load %arg1[%c0_14, %c0_15, %c0_16] : memref<1x4x256xf32, #tpu.memory_space<vmem>>, vector<1x4x256xf32>
    %24 = vector.shape_cast %23 : vector<1x4x256xf32> to vector<4x256xf32>
    %25 = vector.extract_strided_slice %0 {offsets = [0, 0], sizes = [16, 1], strides = [1, 1]} : vector<16x4xf32> to vector<16x1xf32>
    %26 = vector.extract_strided_slice %24 {offsets = [0, 0], sizes = [1, 256], strides = [1, 1]} : vector<4x256xf32> to vector<1x256xf32>
    %27 = vector.broadcast %25 : vector<16x1xf32> to vector<16x256xf32>
    %28 = vector.broadcast %26 : vector<1x256xf32> to vector<16x256xf32>
    %29 = arith.mulf %27, %28 : vector<16x256xf32>
    %30 = vector.extract_strided_slice %0 {offsets = [0, 1], sizes = [16, 1], strides = [1, 1]} : vector<16x4xf32> to vector<16x1xf32>
    %31 = vector.extract_strided_slice %24 {offsets = [1, 0], sizes = [1, 256], strides = [1, 1]} : vector<4x256xf32> to vector<1x256xf32>
    %32 = vector.broadcast %30 : vector<16x1xf32> to vector<16x256xf32>
    %33 = vector.broadcast %31 : vector<1x256xf32> to vector<16x256xf32>
    %34 = arith.mulf %32, %33 : vector<16x256xf32>
    %35 = arith.addf %29, %34 : vector<16x256xf32>
    %36 = vector.extract_strided_slice %0 {offsets = [0, 2], sizes = [16, 1], strides = [1, 1]} : vector<16x4xf32> to vector<16x1xf32>
    %37 = vector.extract_strided_slice %24 {offsets = [2, 0], sizes = [1, 256], strides = [1, 1]} : vector<4x256xf32> to vector<1x256xf32>
    %38 = vector.broadcast %36 : vector<16x1xf32> to vector<16x256xf32>
    %39 = vector.broadcast %37 : vector<1x256xf32> to vector<16x256xf32>
    %40 = arith.mulf %38, %39 : vector<16x256xf32>
    %41 = arith.addf %35, %40 : vector<16x256xf32>
    %42 = vector.extract_strided_slice %0 {offsets = [0, 3], sizes = [16, 1], strides = [1, 1]} : vector<16x4xf32> to vector<16x1xf32>
    %43 = vector.extract_strided_slice %24 {offsets = [3, 0], sizes = [1, 256], strides = [1, 1]} : vector<4x256xf32> to vector<1x256xf32>
    %44 = vector.broadcast %42 : vector<16x1xf32> to vector<16x256xf32>
    %45 = vector.broadcast %43 : vector<1x256xf32> to vector<16x256xf32>
    %46 = arith.mulf %44, %45 : vector<16x256xf32>
    %47 = arith.addf %41, %46 : vector<16x256xf32>
    %48 = vector.broadcast %1 : vector<16x1xf32> to vector<16x256xf32>
    %49 = arith.addf %47, %48 : vector<16x256xf32>
    %50 = math.absf %49 : vector<16x256xf32>
    %cst = arith.constant 0.707106769 : f32
    %51 = vector.broadcast %cst : f32 to vector<16x256xf32>
    %52 = arith.mulf %50, %51 : vector<16x256xf32>
    %cst_17 = arith.constant 0.327591091 : f32
    %53 = vector.broadcast %cst_17 : f32 to vector<16x256xf32>
    %54 = arith.mulf %53, %52 : vector<16x256xf32>
    %cst_18 = arith.constant 1.000000e+00 : f32
    %55 = vector.broadcast %cst_18 : f32 to vector<16x256xf32>
    %56 = arith.addf %55, %54 : vector<16x256xf32>
    %57 = tpu.reciprocal %56 : vector<16x256xf32> -> vector<16x256xf32>
    %cst_19 = arith.constant 1.06140542 : f32
    %58 = vector.broadcast %cst_19 : f32 to vector<16x256xf32>
    %59 = arith.mulf %57, %58 : vector<16x256xf32>
    %cst_20 = arith.constant -1.45315206 : f32
    %60 = vector.broadcast %cst_20 : f32 to vector<16x256xf32>
    %61 = arith.addf %60, %59 : vector<16x256xf32>
    %62 = arith.mulf %57, %61 : vector<16x256xf32>
    %cst_21 = arith.constant 1.42141378 : f32
    %63 = vector.broadcast %cst_21 : f32 to vector<16x256xf32>
    %64 = arith.addf %63, %62 : vector<16x256xf32>
    %65 = arith.mulf %57, %64 : vector<16x256xf32>
    %cst_22 = arith.constant -0.284496725 : f32
    %66 = vector.broadcast %cst_22 : f32 to vector<16x256xf32>
    %67 = arith.addf %66, %65 : vector<16x256xf32>
    %68 = arith.mulf %57, %67 : vector<16x256xf32>
    %cst_23 = arith.constant 0.254829586 : f32
    %69 = vector.broadcast %cst_23 : f32 to vector<16x256xf32>
    %70 = arith.addf %69, %68 : vector<16x256xf32>
    %71 = arith.mulf %57, %70 : vector<16x256xf32>
    %cst_24 = arith.constant 5.000000e-01 : f32
    %72 = vector.broadcast %cst_24 : f32 to vector<16x256xf32>
    %73 = arith.mulf %72, %49 : vector<16x256xf32>
    %74 = arith.mulf %73, %71 : vector<16x256xf32>
    %cst_25 = arith.constant 0.000000e+00 : f32
    %75 = vector.broadcast %cst_25 : f32 to vector<16x256xf32>
    %76 = arith.subf %75, %52 : vector<16x256xf32>
    %77 = arith.mulf %76, %52 : vector<16x256xf32>
    %78 = math.exp %77 : vector<16x256xf32>
    %79 = arith.mulf %74, %78 : vector<16x256xf32>
    %cst_26 = arith.constant 0.000000e+00 : f32
    %80 = vector.broadcast %cst_26 : f32 to vector<16x256xf32>
    %81 = arith.cmpf oge, %49, %80 : vector<16x256xf32>
    %82 = arith.subf %49, %79 : vector<16x256xf32>
    %83 = arith.select %81, %82, %79 : vector<16x256xi1>, vector<16x256xf32>
    %84 = vector.extract_strided_slice %2 {offsets = [0, 4], sizes = [16, 1], strides = [1, 1]} : vector<16x9xf32> to vector<16x1xf32>
    %85 = vector.broadcast %84 : vector<16x1xf32> to vector<16x256xf32>
    %86 = arith.mulf %85, %83 : vector<16x256xf32>
    %c17_i32 = arith.constant 17 : i32
    %87 = tpu.dynamic_rotate %83 by %c17_i32 dim 1 : vector<16x256xf32>, i32 -> vector<16x256xf32>
    %cst_27 = arith.constant 0.000000e+00 : f32
    %88 = vector.shape_cast %19 : vector<1x256xi1> to vector<1x256xi1>
    %89 = vector.broadcast %88 : vector<1x256xi1> to vector<16x256xi1>
    %90 = vector.broadcast %cst_27 : f32 to vector<16x256xf32>
    %91 = arith.select %89, %87, %90 : vector<16x256xi1>, vector<16x256xf32>
    %92 = vector.extract_strided_slice %2 {offsets = [0, 0], sizes = [16, 1], strides = [1, 1]} : vector<16x9xf32> to vector<16x1xf32>
    %93 = vector.broadcast %92 : vector<16x1xf32> to vector<16x256xf32>
    %94 = arith.mulf %93, %91 : vector<16x256xf32>
    %95 = arith.addf %86, %94 : vector<16x256xf32>
    %c16_i32 = arith.constant 16 : i32
    %96 = tpu.dynamic_rotate %83 by %c16_i32 dim 1 : vector<16x256xf32>, i32 -> vector<16x256xf32>
    %cst_28 = arith.constant 0.000000e+00 : f32
    %97 = vector.shape_cast %16 : vector<1x256xi1> to vector<1x256xi1>
    %98 = vector.broadcast %97 : vector<1x256xi1> to vector<16x256xi1>
    %99 = vector.broadcast %cst_28 : f32 to vector<16x256xf32>
    %100 = arith.select %98, %96, %99 : vector<16x256xi1>, vector<16x256xf32>
    %101 = vector.extract_strided_slice %2 {offsets = [0, 1], sizes = [16, 1], strides = [1, 1]} : vector<16x9xf32> to vector<16x1xf32>
    %102 = vector.broadcast %101 : vector<16x1xf32> to vector<16x256xf32>
    %103 = arith.mulf %102, %100 : vector<16x256xf32>
    %104 = arith.addf %95, %103 : vector<16x256xf32>
    %c15_i32_29 = arith.constant 15 : i32
    %105 = tpu.dynamic_rotate %83 by %c15_i32_29 dim 1 : vector<16x256xf32>, i32 -> vector<16x256xf32>
    %cst_30 = arith.constant 0.000000e+00 : f32
    %106 = vector.shape_cast %20 : vector<1x256xi1> to vector<1x256xi1>
    %107 = vector.broadcast %106 : vector<1x256xi1> to vector<16x256xi1>
    %108 = vector.broadcast %cst_30 : f32 to vector<16x256xf32>
    %109 = arith.select %107, %105, %108 : vector<16x256xi1>, vector<16x256xf32>
    %110 = vector.extract_strided_slice %2 {offsets = [0, 2], sizes = [16, 1], strides = [1, 1]} : vector<16x9xf32> to vector<16x1xf32>
    %111 = vector.broadcast %110 : vector<16x1xf32> to vector<16x256xf32>
    %112 = arith.mulf %111, %109 : vector<16x256xf32>
    %113 = arith.addf %104, %112 : vector<16x256xf32>
    %c1_i32_31 = arith.constant 1 : i32
    %114 = tpu.dynamic_rotate %83 by %c1_i32_31 dim 1 : vector<16x256xf32>, i32 -> vector<16x256xf32>
    %cst_32 = arith.constant 0.000000e+00 : f32
    %115 = vector.shape_cast %12 : vector<1x256xi1> to vector<1x256xi1>
    %116 = vector.broadcast %115 : vector<1x256xi1> to vector<16x256xi1>
    %117 = vector.broadcast %cst_32 : f32 to vector<16x256xf32>
    %118 = arith.select %116, %114, %117 : vector<16x256xi1>, vector<16x256xf32>
    %119 = vector.extract_strided_slice %2 {offsets = [0, 3], sizes = [16, 1], strides = [1, 1]} : vector<16x9xf32> to vector<16x1xf32>
    %120 = vector.broadcast %119 : vector<16x1xf32> to vector<16x256xf32>
    %121 = arith.mulf %120, %118 : vector<16x256xf32>
    %122 = arith.addf %113, %121 : vector<16x256xf32>
    %c255_i32 = arith.constant 255 : i32
    %123 = tpu.dynamic_rotate %83 by %c255_i32 dim 1 : vector<16x256xf32>, i32 -> vector<16x256xf32>
    %cst_33 = arith.constant 0.000000e+00 : f32
    %124 = vector.shape_cast %14 : vector<1x256xi1> to vector<1x256xi1>
    %125 = vector.broadcast %124 : vector<1x256xi1> to vector<16x256xi1>
    %126 = vector.broadcast %cst_33 : f32 to vector<16x256xf32>
    %127 = arith.select %125, %123, %126 : vector<16x256xi1>, vector<16x256xf32>
    %128 = vector.extract_strided_slice %2 {offsets = [0, 5], sizes = [16, 1], strides = [1, 1]} : vector<16x9xf32> to vector<16x1xf32>
    %129 = vector.broadcast %128 : vector<16x1xf32> to vector<16x256xf32>
    %130 = arith.mulf %129, %127 : vector<16x256xf32>
    %131 = arith.addf %122, %130 : vector<16x256xf32>
    %c241_i32 = arith.constant 241 : i32
    %132 = tpu.dynamic_rotate %83 by %c241_i32 dim 1 : vector<16x256xf32>, i32 -> vector<16x256xf32>
    %cst_34 = arith.constant 0.000000e+00 : f32
    %133 = vector.shape_cast %21 : vector<1x256xi1> to vector<1x256xi1>
    %134 = vector.broadcast %133 : vector<1x256xi1> to vector<16x256xi1>
    %135 = vector.broadcast %cst_34 : f32 to vector<16x256xf32>
    %136 = arith.select %134, %132, %135 : vector<16x256xi1>, vector<16x256xf32>
    %137 = vector.extract_strided_slice %2 {offsets = [0, 6], sizes = [16, 1], strides = [1, 1]} : vector<16x9xf32> to vector<16x1xf32>
    %138 = vector.broadcast %137 : vector<16x1xf32> to vector<16x256xf32>
    %139 = arith.mulf %138, %136 : vector<16x256xf32>
    %140 = arith.addf %131, %139 : vector<16x256xf32>
    %c240_i32 = arith.constant 240 : i32
    %141 = tpu.dynamic_rotate %83 by %c240_i32 dim 1 : vector<16x256xf32>, i32 -> vector<16x256xf32>
    %cst_35 = arith.constant 0.000000e+00 : f32
    %142 = vector.shape_cast %18 : vector<1x256xi1> to vector<1x256xi1>
    %143 = vector.broadcast %142 : vector<1x256xi1> to vector<16x256xi1>
    %144 = vector.broadcast %cst_35 : f32 to vector<16x256xf32>
    %145 = arith.select %143, %141, %144 : vector<16x256xi1>, vector<16x256xf32>
    %146 = vector.extract_strided_slice %2 {offsets = [0, 7], sizes = [16, 1], strides = [1, 1]} : vector<16x9xf32> to vector<16x1xf32>
    %147 = vector.broadcast %146 : vector<16x1xf32> to vector<16x256xf32>
    %148 = arith.mulf %147, %145 : vector<16x256xf32>
    %149 = arith.addf %140, %148 : vector<16x256xf32>
    %c239_i32 = arith.constant 239 : i32
    %150 = tpu.dynamic_rotate %83 by %c239_i32 dim 1 : vector<16x256xf32>, i32 -> vector<16x256xf32>
    %cst_36 = arith.constant 0.000000e+00 : f32
    %151 = vector.shape_cast %22 : vector<1x256xi1> to vector<1x256xi1>
    %152 = vector.broadcast %151 : vector<1x256xi1> to vector<16x256xi1>
    %153 = vector.broadcast %cst_36 : f32 to vector<16x256xf32>
    %154 = arith.select %152, %150, %153 : vector<16x256xi1>, vector<16x256xf32>
    %155 = vector.extract_strided_slice %2 {offsets = [0, 8], sizes = [16, 1], strides = [1, 1]} : vector<16x9xf32> to vector<16x1xf32>
    %156 = vector.broadcast %155 : vector<16x1xf32> to vector<16x256xf32>
    %157 = arith.mulf %156, %154 : vector<16x256xf32>
    %158 = arith.addf %149, %157 : vector<16x256xf32>
    %159 = vector.broadcast %3 : vector<16x1xf32> to vector<16x256xf32>
    %160 = arith.addf %158, %159 : vector<16x256xf32>
    %161 = math.absf %160 : vector<16x256xf32>
    %cst_37 = arith.constant 0.707106769 : f32
    %162 = vector.broadcast %cst_37 : f32 to vector<16x256xf32>
    %163 = arith.mulf %161, %162 : vector<16x256xf32>
    %cst_38 = arith.constant 0.327591091 : f32
    %164 = vector.broadcast %cst_38 : f32 to vector<16x256xf32>
    %165 = arith.mulf %164, %163 : vector<16x256xf32>
    %cst_39 = arith.constant 1.000000e+00 : f32
    %166 = vector.broadcast %cst_39 : f32 to vector<16x256xf32>
    %167 = arith.addf %166, %165 : vector<16x256xf32>
    %168 = tpu.reciprocal %167 : vector<16x256xf32> -> vector<16x256xf32>
    %cst_40 = arith.constant 1.06140542 : f32
    %169 = vector.broadcast %cst_40 : f32 to vector<16x256xf32>
    %170 = arith.mulf %168, %169 : vector<16x256xf32>
    %cst_41 = arith.constant -1.45315206 : f32
    %171 = vector.broadcast %cst_41 : f32 to vector<16x256xf32>
    %172 = arith.addf %171, %170 : vector<16x256xf32>
    %173 = arith.mulf %168, %172 : vector<16x256xf32>
    %cst_42 = arith.constant 1.42141378 : f32
    %174 = vector.broadcast %cst_42 : f32 to vector<16x256xf32>
    %175 = arith.addf %174, %173 : vector<16x256xf32>
    %176 = arith.mulf %168, %175 : vector<16x256xf32>
    %cst_43 = arith.constant -0.284496725 : f32
    %177 = vector.broadcast %cst_43 : f32 to vector<16x256xf32>
    %178 = arith.addf %177, %176 : vector<16x256xf32>
    %179 = arith.mulf %168, %178 : vector<16x256xf32>
    %cst_44 = arith.constant 0.254829586 : f32
    %180 = vector.broadcast %cst_44 : f32 to vector<16x256xf32>
    %181 = arith.addf %180, %179 : vector<16x256xf32>
    %182 = arith.mulf %168, %181 : vector<16x256xf32>
    %cst_45 = arith.constant 5.000000e-01 : f32
    %183 = vector.broadcast %cst_45 : f32 to vector<16x256xf32>
    %184 = arith.mulf %183, %160 : vector<16x256xf32>
    %185 = arith.mulf %184, %182 : vector<16x256xf32>
    %cst_46 = arith.constant 0.000000e+00 : f32
    %186 = vector.broadcast %cst_46 : f32 to vector<16x256xf32>
    %187 = arith.subf %186, %163 : vector<16x256xf32>
    %188 = arith.mulf %187, %163 : vector<16x256xf32>
    %189 = math.exp %188 : vector<16x256xf32>
    %190 = arith.mulf %185, %189 : vector<16x256xf32>
    %cst_47 = arith.constant 0.000000e+00 : f32
    %191 = vector.broadcast %cst_47 : f32 to vector<16x256xf32>
    %192 = arith.cmpf oge, %160, %191 : vector<16x256xf32>
    %193 = arith.subf %160, %190 : vector<16x256xf32>
    %194 = arith.select %192, %193, %190 : vector<16x256xi1>, vector<16x256xf32>
    %195 = arith.addf %83, %194 : vector<16x256xf32>
    %196 = vector.extract_strided_slice %4 {offsets = [0, 0], sizes = [4, 1], strides = [1, 1]} : vector<4x16xf32> to vector<4x1xf32>
    %197 = vector.extract_strided_slice %195 {offsets = [0, 0], sizes = [1, 256], strides = [1, 1]} : vector<16x256xf32> to vector<1x256xf32>
    %198 = vector.broadcast %196 : vector<4x1xf32> to vector<4x256xf32>
    %199 = vector.broadcast %197 : vector<1x256xf32> to vector<4x256xf32>
    %200 = arith.mulf %198, %199 : vector<4x256xf32>
    %201 = vector.extract_strided_slice %4 {offsets = [0, 1], sizes = [4, 1], strides = [1, 1]} : vector<4x16xf32> to vector<4x1xf32>
    %202 = vector.extract_strided_slice %195 {offsets = [1, 0], sizes = [1, 256], strides = [1, 1]} : vector<16x256xf32> to vector<1x256xf32>
    %203 = vector.broadcast %201 : vector<4x1xf32> to vector<4x256xf32>
    %204 = vector.broadcast %202 : vector<1x256xf32> to vector<4x256xf32>
    %205 = arith.mulf %203, %204 : vector<4x256xf32>
    %206 = arith.addf %200, %205 : vector<4x256xf32>
    %207 = vector.extract_strided_slice %4 {offsets = [0, 2], sizes = [4, 1], strides = [1, 1]} : vector<4x16xf32> to vector<4x1xf32>
    %208 = vector.extract_strided_slice %195 {offsets = [2, 0], sizes = [1, 256], strides = [1, 1]} : vector<16x256xf32> to vector<1x256xf32>
    %209 = vector.broadcast %207 : vector<4x1xf32> to vector<4x256xf32>
    %210 = vector.broadcast %208 : vector<1x256xf32> to vector<4x256xf32>
    %211 = arith.mulf %209, %210 : vector<4x256xf32>
    %212 = arith.addf %206, %211 : vector<4x256xf32>
    %213 = vector.extract_strided_slice %4 {offsets = [0, 3], sizes = [4, 1], strides = [1, 1]} : vector<4x16xf32> to vector<4x1xf32>
    %214 = vector.extract_strided_slice %195 {offsets = [3, 0], sizes = [1, 256], strides = [1, 1]} : vector<16x256xf32> to vector<1x256xf32>
    %215 = vector.broadcast %213 : vector<4x1xf32> to vector<4x256xf32>
    %216 = vector.broadcast %214 : vector<1x256xf32> to vector<4x256xf32>
    %217 = arith.mulf %215, %216 : vector<4x256xf32>
    %218 = arith.addf %212, %217 : vector<4x256xf32>
    %219 = vector.extract_strided_slice %4 {offsets = [0, 4], sizes = [4, 1], strides = [1, 1]} : vector<4x16xf32> to vector<4x1xf32>
    %220 = vector.extract_strided_slice %195 {offsets = [4, 0], sizes = [1, 256], strides = [1, 1]} : vector<16x256xf32> to vector<1x256xf32>
    %221 = vector.broadcast %219 : vector<4x1xf32> to vector<4x256xf32>
    %222 = vector.broadcast %220 : vector<1x256xf32> to vector<4x256xf32>
    %223 = arith.mulf %221, %222 : vector<4x256xf32>
    %224 = arith.addf %218, %223 : vector<4x256xf32>
    %225 = vector.extract_strided_slice %4 {offsets = [0, 5], sizes = [4, 1], strides = [1, 1]} : vector<4x16xf32> to vector<4x1xf32>
    %226 = vector.extract_strided_slice %195 {offsets = [5, 0], sizes = [1, 256], strides = [1, 1]} : vector<16x256xf32> to vector<1x256xf32>
    %227 = vector.broadcast %225 : vector<4x1xf32> to vector<4x256xf32>
    %228 = vector.broadcast %226 : vector<1x256xf32> to vector<4x256xf32>
    %229 = arith.mulf %227, %228 : vector<4x256xf32>
    %230 = arith.addf %224, %229 : vector<4x256xf32>
    %231 = vector.extract_strided_slice %4 {offsets = [0, 6], sizes = [4, 1], strides = [1, 1]} : vector<4x16xf32> to vector<4x1xf32>
    %232 = vector.extract_strided_slice %195 {offsets = [6, 0], sizes = [1, 256], strides = [1, 1]} : vector<16x256xf32> to vector<1x256xf32>
    %233 = vector.broadcast %231 : vector<4x1xf32> to vector<4x256xf32>
    %234 = vector.broadcast %232 : vector<1x256xf32> to vector<4x256xf32>
    %235 = arith.mulf %233, %234 : vector<4x256xf32>
    %236 = arith.addf %230, %235 : vector<4x256xf32>
    %237 = vector.extract_strided_slice %4 {offsets = [0, 7], sizes = [4, 1], strides = [1, 1]} : vector<4x16xf32> to vector<4x1xf32>
    %238 = vector.extract_strided_slice %195 {offsets = [7, 0], sizes = [1, 256], strides = [1, 1]} : vector<16x256xf32> to vector<1x256xf32>
    %239 = vector.broadcast %237 : vector<4x1xf32> to vector<4x256xf32>
    %240 = vector.broadcast %238 : vector<1x256xf32> to vector<4x256xf32>
    %241 = arith.mulf %239, %240 : vector<4x256xf32>
    %242 = arith.addf %236, %241 : vector<4x256xf32>
    %243 = vector.extract_strided_slice %4 {offsets = [0, 8], sizes = [4, 1], strides = [1, 1]} : vector<4x16xf32> to vector<4x1xf32>
    %244 = vector.extract_strided_slice %195 {offsets = [8, 0], sizes = [1, 256], strides = [1, 1]} : vector<16x256xf32> to vector<1x256xf32>
    %245 = vector.broadcast %243 : vector<4x1xf32> to vector<4x256xf32>
    %246 = vector.broadcast %244 : vector<1x256xf32> to vector<4x256xf32>
    %247 = arith.mulf %245, %246 : vector<4x256xf32>
    %248 = arith.addf %242, %247 : vector<4x256xf32>
    %249 = vector.extract_strided_slice %4 {offsets = [0, 9], sizes = [4, 1], strides = [1, 1]} : vector<4x16xf32> to vector<4x1xf32>
    %250 = vector.extract_strided_slice %195 {offsets = [9, 0], sizes = [1, 256], strides = [1, 1]} : vector<16x256xf32> to vector<1x256xf32>
    %251 = vector.broadcast %249 : vector<4x1xf32> to vector<4x256xf32>
    %252 = vector.broadcast %250 : vector<1x256xf32> to vector<4x256xf32>
    %253 = arith.mulf %251, %252 : vector<4x256xf32>
    %254 = arith.addf %248, %253 : vector<4x256xf32>
    %255 = vector.extract_strided_slice %4 {offsets = [0, 10], sizes = [4, 1], strides = [1, 1]} : vector<4x16xf32> to vector<4x1xf32>
    %256 = vector.extract_strided_slice %195 {offsets = [10, 0], sizes = [1, 256], strides = [1, 1]} : vector<16x256xf32> to vector<1x256xf32>
    %257 = vector.broadcast %255 : vector<4x1xf32> to vector<4x256xf32>
    %258 = vector.broadcast %256 : vector<1x256xf32> to vector<4x256xf32>
    %259 = arith.mulf %257, %258 : vector<4x256xf32>
    %260 = arith.addf %254, %259 : vector<4x256xf32>
    %261 = vector.extract_strided_slice %4 {offsets = [0, 11], sizes = [4, 1], strides = [1, 1]} : vector<4x16xf32> to vector<4x1xf32>
    %262 = vector.extract_strided_slice %195 {offsets = [11, 0], sizes = [1, 256], strides = [1, 1]} : vector<16x256xf32> to vector<1x256xf32>
    %263 = vector.broadcast %261 : vector<4x1xf32> to vector<4x256xf32>
    %264 = vector.broadcast %262 : vector<1x256xf32> to vector<4x256xf32>
    %265 = arith.mulf %263, %264 : vector<4x256xf32>
    %266 = arith.addf %260, %265 : vector<4x256xf32>
    %267 = vector.extract_strided_slice %4 {offsets = [0, 12], sizes = [4, 1], strides = [1, 1]} : vector<4x16xf32> to vector<4x1xf32>
    %268 = vector.extract_strided_slice %195 {offsets = [12, 0], sizes = [1, 256], strides = [1, 1]} : vector<16x256xf32> to vector<1x256xf32>
    %269 = vector.broadcast %267 : vector<4x1xf32> to vector<4x256xf32>
    %270 = vector.broadcast %268 : vector<1x256xf32> to vector<4x256xf32>
    %271 = arith.mulf %269, %270 : vector<4x256xf32>
    %272 = arith.addf %266, %271 : vector<4x256xf32>
    %273 = vector.extract_strided_slice %4 {offsets = [0, 13], sizes = [4, 1], strides = [1, 1]} : vector<4x16xf32> to vector<4x1xf32>
    %274 = vector.extract_strided_slice %195 {offsets = [13, 0], sizes = [1, 256], strides = [1, 1]} : vector<16x256xf32> to vector<1x256xf32>
    %275 = vector.broadcast %273 : vector<4x1xf32> to vector<4x256xf32>
    %276 = vector.broadcast %274 : vector<1x256xf32> to vector<4x256xf32>
    %277 = arith.mulf %275, %276 : vector<4x256xf32>
    %278 = arith.addf %272, %277 : vector<4x256xf32>
    %279 = vector.extract_strided_slice %4 {offsets = [0, 14], sizes = [4, 1], strides = [1, 1]} : vector<4x16xf32> to vector<4x1xf32>
    %280 = vector.extract_strided_slice %195 {offsets = [14, 0], sizes = [1, 256], strides = [1, 1]} : vector<16x256xf32> to vector<1x256xf32>
    %281 = vector.broadcast %279 : vector<4x1xf32> to vector<4x256xf32>
    %282 = vector.broadcast %280 : vector<1x256xf32> to vector<4x256xf32>
    %283 = arith.mulf %281, %282 : vector<4x256xf32>
    %284 = arith.addf %278, %283 : vector<4x256xf32>
    %285 = vector.extract_strided_slice %4 {offsets = [0, 15], sizes = [4, 1], strides = [1, 1]} : vector<4x16xf32> to vector<4x1xf32>
    %286 = vector.extract_strided_slice %195 {offsets = [15, 0], sizes = [1, 256], strides = [1, 1]} : vector<16x256xf32> to vector<1x256xf32>
    %287 = vector.broadcast %285 : vector<4x1xf32> to vector<4x256xf32>
    %288 = vector.broadcast %286 : vector<1x256xf32> to vector<4x256xf32>
    %289 = arith.mulf %287, %288 : vector<4x256xf32>
    %290 = arith.addf %284, %289 : vector<4x256xf32>
    %291 = vector.broadcast %5 : vector<4x1xf32> to vector<4x256xf32>
    %292 = arith.addf %290, %291 : vector<4x256xf32>
    %c0_48 = arith.constant 0 : index
    %c0_49 = arith.constant 0 : index
    %c0_50 = arith.constant 0 : index
    %293 = vector.load %arg8[%c0_48, %c0_49, %c0_50] : memref<1x4x256xf32, #tpu.memory_space<vmem>>, vector<1x4x256xf32>
    %294 = vector.shape_cast %293 : vector<1x4x256xf32> to vector<4x256xf32>
    %295 = vector.shape_cast %292 : vector<4x256xf32> to vector<1x4x256xf32>
    tpu.vector_store %arg8[%c0_48, %c0_49, %c0_50], %295 {strides = array<i32>} : memref<1x4x256xf32, #tpu.memory_space<vmem>>, vector<1x4x256xf32>,
    return
  }
  func.func @transform_0(%arg0: i32) -> (i32, i32, i32) {
    %c0_i32 = arith.constant 0 : i32
    %c0_i32_0 = arith.constant 0 : i32
    %c0_i32_1 = arith.constant 0 : i32
    return %arg0, %c0_i32, %c0_i32_0 : i32, i32, i32
  }
  func.func @transform_1(%arg0: i32) -> (i32, i32) {
    %c0_i32 = arith.constant 0 : i32
    %c0_i32_0 = arith.constant 0 : i32
    %c0_i32_1 = arith.constant 0 : i32
    return %c0_i32, %c0_i32_0 : i32, i32
  }
  func.func @transform_2(%arg0: i32) -> (i32, i32) {
    %c0_i32 = arith.constant 0 : i32
    %c0_i32_0 = arith.constant 0 : i32
    %c0_i32_1 = arith.constant 0 : i32
    return %c0_i32, %c0_i32_0 : i32, i32
  }
  func.func @transform_3(%arg0: i32) -> (i32, i32) {
    %c0_i32 = arith.constant 0 : i32
    %c0_i32_0 = arith.constant 0 : i32
    %c0_i32_1 = arith.constant 0 : i32
    return %c0_i32, %c0_i32_0 : i32, i32
  }
  func.func @transform_4(%arg0: i32) -> (i32, i32) {
    %c0_i32 = arith.constant 0 : i32
    %c0_i32_0 = arith.constant 0 : i32
    %c0_i32_1 = arith.constant 0 : i32
    return %c0_i32, %c0_i32_0 : i32, i32
  }
  func.func @transform_5(%arg0: i32) -> (i32, i32) {
    %c0_i32 = arith.constant 0 : i32
    %c0_i32_0 = arith.constant 0 : i32
    %c0_i32_1 = arith.constant 0 : i32
    return %c0_i32, %c0_i32_0 : i32, i32
  }
  func.func @transform_6(%arg0: i32) -> (i32, i32) {
    %c0_i32 = arith.constant 0 : i32
    %c0_i32_0 = arith.constant 0 : i32
    %c0_i32_1 = arith.constant 0 : i32
    return %c0_i32, %c0_i32_0 : i32, i32
  }
  func.func @transform_7(%arg0: i32) -> (i32, i32, i32) {
    %c0_i32 = arith.constant 0 : i32
    %c0_i32_0 = arith.constant 0 : i32
    %c0_i32_1 = arith.constant 0 : i32
    return %arg0, %c0_i32, %c0_i32_0 : i32, i32, i32
  }
}

</mosaic_0001>

<llo_original>
// kernel: tpu_custom_call.1
$region0: #{tpu_custom_call.1}
  #allocation0 [shape = 'u32[]', space=smem, size = 0x4, offset = 0x4, fixed_abs, tag = 'smem constant byte address 0x4 - core index']
  #allocation1 [shape = 'u32[144,128]{1,0:T(1,128)}', space=vmem, size = 0x12000, scoped, tag = 'internal scratch']
  %s0 = inlined_call_operand.vmem [shape: f32[2,4,256], index: 0, kind: input, shape index: {}]
  %s1 = inlined_call_operand.vmem [shape: f32[16,4], index: 1, kind: input, shape index: {}]
  %s2 = inlined_call_operand.vmem [shape: f32[16,1], index: 2, kind: input, shape index: {}]
  %s3 = inlined_call_operand.vmem [shape: f32[16,9], index: 3, kind: input, shape index: {}]
  %s4 = inlined_call_operand.vmem [shape: f32[16,1], index: 4, kind: input, shape index: {}]
  %s5 = inlined_call_operand.vmem [shape: f32[4,16], index: 5, kind: input, shape index: {}]
  %s6 = inlined_call_operand.vmem [shape: f32[4,1], index: 6, kind: input, shape index: {}]
  %s7 = inlined_call_operand.hbm [shape: f32[2,4,256], index: 7, kind: output, shape index: {}]
  %s8 = sld [smem:[#allocation0]]
  $region61: #{tpu_custom_call.1} parent=0
    _
  %s10 = ssub.s32 1, %s8
  %s11 = scalar_select 0, %s10, %s8
  $region1: #{tpu_custom_call.1} parent=0
    #allocation2 [shape = 'u8[8192]{0}', space=vmem, size = 0x2000, scoped, tag = 'output window, operand 0']
    #allocation3 [shape = 's32[2]{0}', space=sflag, size = 0x8, scoped, tag = 'scoped memory for tpu_custom_call.1']
    %12 = vsyncpa [#allocation3], 0
    %s13 = scalar_lea.sflag [#allocation3], 1
    %14 = vsyncpa %s13, 0
    loop: start=0, step=1, limit=4
    $region2: #{tpu_custom_call.1} parent=1 // loop_pre_header
      _
    $region3: #{tpu_custom_call.1} parent=1 // loop_header
      %s16 = sphi 0, %s20
      %p17 = scmp.ge.s32.totalorder %s16, 4
      %s26 = sphi 0, %s28
      %s29 = sphi 0, %s26
      %s30 = sphi 0, %s29
      %s46 = sphi 0, %s30
      %s50 = sphi 0, %s50
      %s52 = sphi 0, %s50
      %s53 = sphi 0, %s52
      %s67 = sphi 0, %s53
      %s71 = sphi 0, %s71
      %s73 = sphi 0, %s71
      %s74 = sphi 0, %s73
      %s88 = sphi 0, %s74
      %s92 = sphi 0, %s92
      %s94 = sphi 0, %s92
      %s95 = sphi 0, %s94
      %s109 = sphi 0, %s95
      %s113 = sphi 0, %s113
      %s115 = sphi 0, %s113
      %s116 = sphi 0, %s115
      %s130 = sphi 0, %s116
      %s134 = sphi 0, %s134
      %s136 = sphi 0, %s134
      %s137 = sphi 0, %s136
      %s151 = sphi 0, %s137
      %s155 = sphi 0, %s155
      %s157 = sphi 0, %s155
      %s158 = sphi 0, %s157
      %s172 = sphi 0, %s158
      %s178 = sphi 0, %s180
      %s181 = sphi 0, %s178
      %s182 = sphi 0, %s181
      %s198 = sphi 0, %s182
    $region4: #{tpu_custom_call.1} parent=1 // loop_header_branch
      %19 = sbr.rel (%p17) target = $region8
    $region5: #{tpu_custom_call.1} parent=1 // loop_body
      %s21 = ssub.s32 %s16, 1
      %s22 = ssub.s32 %s16, 2
      %s23 = sadd.s32 %s16, 1
      %s24 = ssub.s32 %s16, %s23
      %p25 = scmp.eq.s32.totalorder %s24, 0
      %s27 = sadd.s32 %s26, 1
      %s28 = scalar_select %p25, %s26, %s27
      %p31 = pneg %p25
      %p32 = scmp.eq.s32.totalorder %s16, 1
      %p33 = por %p31, %p32
      %p34 = scmp.ne.s32.totalorder %s26, %s29
      %p35 = scmp.eq.s32.totalorder %s16, 0
      %p36 = por %p34, %p35
      %p37 = scmp.ne.s32.totalorder %s26, %s29
      %p38 = scmp.eq.s32.totalorder %s21, 1
      %p39 = por %p37, %p38
      %p40 = scmp.ne.s32.totalorder %s29, %s30
      %p41 = scmp.eq.s32.totalorder %s21, 0
      %p42 = por %p40, %p41
      %p43 = scmp.ne.s32.totalorder %s29, %s30
      %p44 = scmp.eq.s32.totalorder %s22, 1
      %p45 = por %p43, %p44
      %p47 = scmp.ne.s32.totalorder %s30, %s46
      %p48 = scmp.eq.s32.totalorder %s22, 0
      %p49 = por %p47, %p48
      %s51 = sadd.s32 %s50, 1
      %p54 = scmp.eq.s32.totalorder %s16, 1
      %p55 = scmp.ne.s32.totalorder %s50, %s52
      %p56 = scmp.eq.s32.totalorder %s16, 0
      %p57 = por %p55, %p56
      %p58 = scmp.ne.s32.totalorder %s50, %s52
      %p59 = scmp.eq.s32.totalorder %s21, 1
      %p60 = por %p58, %p59
      %p61 = scmp.ne.s32.totalorder %s52, %s53
      %p62 = scmp.eq.s32.totalorder %s21, 0
      %p63 = por %p61, %p62
      %p64 = scmp.ne.s32.totalorder %s52, %s53
      %p65 = scmp.eq.s32.totalorder %s22, 1
      %p66 = por %p64, %p65
      %p68 = scmp.ne.s32.totalorder %s53, %s67
      %p69 = scmp.eq.s32.totalorder %s22, 0
      %p70 = por %p68, %p69
      %s72 = sadd.s32 %s71, 1
      %p75 = scmp.eq.s32.totalorder %s16, 1
      %p76 = scmp.ne.s32.totalorder %s71, %s73
      %p77 = scmp.eq.s32.totalorder %s16, 0
      %p78 = por %p76, %p77
      %p79 = scmp.ne.s32.totalorder %s71, %s73
      %p80 = scmp.eq.s32.totalorder %s21, 1
      %p81 = por %p79, %p80
      %p82 = scmp.ne.s32.totalorder %s73, %s74
      %p83 = scmp.eq.s32.totalorder %s21, 0
      %p84 = por %p82, %p83
      %p85 = scmp.ne.s32.totalorder %s73, %s74
      %p86 = scmp.eq.s32.totalorder %s22, 1
      %p87 = por %p85, %p86
      %p89 = scmp.ne.s32.totalorder %s74, %s88
      %p90 = scmp.eq.s32.totalorder %s22, 0
      %p91 = por %p89, %p90
      %s93 = sadd.s32 %s92, 1
      %p96 = scmp.eq.s32.totalorder %s16, 1
      %p97 = scmp.ne.s32.totalorder %s92, %s94
      %p98 = scmp.eq.s32.totalorder %s16, 0
      %p99 = por %p97, %p98
      %p100 = scmp.ne.s32.totalorder %s92, %s94
      %p101 = scmp.eq.s32.totalorder %s21, 1
      %p102 = por %p100, %p101
      %p103 = scmp.ne.s32.totalorder %s94, %s95
      %p104 = scmp.eq.s32.totalorder %s21, 0
      %p105 = por %p103, %p104
      %p106 = scmp.ne.s32.totalorder %s94, %s95
      %p107 = scmp.eq.s32.totalorder %s22, 1
      %p108 = por %p106, %p107
      %p110 = scmp.ne.s32.totalorder %s95, %s109
      %p111 = scmp.eq.s32.totalorder %s22, 0
      %p112 = por %p110, %p111
      %s114 = sadd.s32 %s113, 1
      %p117 = scmp.eq.s32.totalorder %s16, 1
      %p118 = scmp.ne.s32.totalorder %s113, %s115
      %p119 = scmp.eq.s32.totalorder %s16, 0
      %p120 = por %p118, %p119
      %p121 = scmp.ne.s32.totalorder %s113, %s115
      %p122 = scmp.eq.s32.totalorder %s21, 1
      %p123 = por %p121, %p122
      %p124 = scmp.ne.s32.totalorder %s115, %s116
      %p125 = scmp.eq.s32.totalorder %s21, 0
      %p126 = por %p124, %p125
      %p127 = scmp.ne.s32.totalorder %s115, %s116
      %p128 = scmp.eq.s32.totalorder %s22, 1
      %p129 = por %p127, %p128
      %p131 = scmp.ne.s32.totalorder %s116, %s130
      %p132 = scmp.eq.s32.totalorder %s22, 0
      %p133 = por %p131, %p132
      %s135 = sadd.s32 %s134, 1
      %p138 = scmp.eq.s32.totalorder %s16, 1
      %p139 = scmp.ne.s32.totalorder %s134, %s136
      %p140 = scmp.eq.s32.totalorder %s16, 0
      %p141 = por %p139, %p140
      %p142 = scmp.ne.s32.totalorder %s134, %s136
      %p143 = scmp.eq.s32.totalorder %s21, 1
      %p144 = por %p142, %p143
      %p145 = scmp.ne.s32.totalorder %s136, %s137
      %p146 = scmp.eq.s32.totalorder %s21, 0
      %p147 = por %p145, %p146
      %p148 = scmp.ne.s32.totalorder %s136, %s137
      %p149 = scmp.eq.s32.totalorder %s22, 1
      %p150 = por %p148, %p149
      %p152 = scmp.ne.s32.totalorder %s137, %s151
      %p153 = scmp.eq.s32.totalorder %s22, 0
      %p154 = por %p152, %p153
      %s156 = sadd.s32 %s155, 1
      %p159 = scmp.eq.s32.totalorder %s16, 1
      %p160 = scmp.ne.s32.totalorder %s155, %s157
      %p161 = scmp.eq.s32.totalorder %s16, 0
      %p162 = por %p160, %p161
      %p163 = scmp.ne.s32.totalorder %s155, %s157
      %p164 = scmp.eq.s32.totalorder %s21, 1
      %p165 = por %p163, %p164
      %p166 = scmp.ne.s32.totalorder %s157, %s158
      %p167 = scmp.eq.s32.totalorder %s21, 0
      %p168 = por %p166, %p167
      %p169 = scmp.ne.s32.totalorder %s157, %s158
      %p170 = scmp.eq.s32.totalorder %s22, 1
      %p171 = por %p169, %p170
      %p173 = scmp.ne.s32.totalorder %s158, %s172
      %p174 = scmp.eq.s32.totalorder %s22, 0
      %p175 = por %p173, %p174
      %s176 = ssub.s32 %s16, %s23
      %p177 = scmp.eq.s32.totalorder %s176, 0
      %s179 = sadd.s32 %s178, 1
      %s180 = scalar_select %p177, %s178, %s179
      %p183 = pneg %p177
      %p184 = scmp.eq.s32.totalorder %s16, 1
      %p185 = por %p183, %p184
      %p186 = scmp.ne.s32.totalorder %s178, %s181
      %p187 = scmp.eq.s32.totalorder %s16, 0
      %p188 = por %p186, %p187
      %p189 = scmp.ne.s32.totalorder %s178, %s181
      %p190 = scmp.eq.s32.totalorder %s21, 1
      %p191 = por %p189, %p190
      %p192 = scmp.ne.s32.totalorder %s181, %s182
      %p193 = scmp.eq.s32.totalorder %s21, 0
      %p194 = por %p192, %p193
      %p195 = scmp.ne.s32.totalorder %s181, %s182
      %p196 = scmp.eq.s32.totalorder %s22, 1
      %p197 = por %p195, %p196
      %p199 = scmp.ne.s32.totalorder %s182, %s198
      %p200 = scmp.eq.s32.totalorder %s22, 0
      %p201 = por %p199, %p200
      %p202 = scmp.le.s32.totalorder 1, %s16
      %p203 = scmp.lt.s32.totalorder %s16, 3
      %p204 = pnand %p202, %p203
      %p205 = pneg %p204
      // Predicated region
      $region9: #{tpu_custom_call.1} parent=5 // pred_check
        _
      $region10: #{tpu_custom_call.1} parent=5 // pred_check_branch
        %207 = sbr.rel (%p204) target = $region12
      $region11: #{tpu_custom_call.1} parent=5 // pred_region
        %s208 = ssub.s32 %s16, 1
        // Predicated region
        $region13: #{tpu_custom_call.1} parent=11 // pred_check
          %p209 = pneg %p63
        $region14: #{tpu_custom_call.1} parent=11 // pred_check_branch
          %211 = sbr.rel (%p209) target = $region16
        $region15: #{tpu_custom_call.1} parent=11 // pred_region
          _
        $region16: #{tpu_custom_call.1} parent=11 // pred_fallthru
          _
        // Predicated region
        $region17: #{tpu_custom_call.1} parent=11 // pred_check
          %p212 = pneg %p84
        $region18: #{tpu_custom_call.1} parent=11 // pred_check_branch
          %214 = sbr.rel (%p212) target = $region20
        $region19: #{tpu_custom_call.1} parent=11 // pred_region
          _
        $region20: #{tpu_custom_call.1} parent=11 // pred_fallthru
          _
        // Predicated region
        $region21: #{tpu_custom_call.1} parent=11 // pred_check
          %p215 = pneg %p105
        $region22: #{tpu_custom_call.1} parent=11 // pred_check_branch
          %217 = sbr.rel (%p215) target = $region24
        $region23: #{tpu_custom_call.1} parent=11 // pred_region
          _
        $region24: #{tpu_custom_call.1} parent=11 // pred_fallthru
          _
        // Predicated region
        $region25: #{tpu_custom_call.1} parent=11 // pred_check
          %p218 = pneg %p126
        $region26: #{tpu_custom_call.1} parent=11 // pred_check_branch
          %220 = sbr.rel (%p218) target = $region28
        $region27: #{tpu_custom_call.1} parent=11 // pred_region
          _
        $region28: #{tpu_custom_call.1} parent=11 // pred_fallthru
          _
        // Predicated region
        $region29: #{tpu_custom_call.1} parent=11 // pred_check
          %p221 = pneg %p147
        $region30: #{tpu_custom_call.1} parent=11 // pred_check_branch
          %223 = sbr.rel (%p221) target = $region32
        $region31: #{tpu_custom_call.1} parent=11 // pred_region
          _
        $region32: #{tpu_custom_call.1} parent=11 // pred_fallthru
          _
        // Predicated region
        $region33: #{tpu_custom_call.1} parent=11 // pred_check
          %p224 = pneg %p168
        $region34: #{tpu_custom_call.1} parent=11 // pred_check_branch
          %226 = sbr.rel (%p224) target = $region36
        $region35: #{tpu_custom_call.1} parent=11 // pred_region
          _
        $region36: #{tpu_custom_call.1} parent=11 // pred_fallthru
          _
      $region12: #{tpu_custom_call.1} parent=5 // pred_fallthru
        _
      %p227 = scmp.lt.s32.totalorder %s16, 2
      // Predicated region
      $region37: #{tpu_custom_call.1} parent=5 // pred_check
        %p228 = pneg %p227
      $region38: #{tpu_custom_call.1} parent=5 // pred_check_branch
        %230 = sbr.rel (%p228) target = $region40
      $region39: #{tpu_custom_call.1} parent=5 // pred_region
        // Predicated region
        $region41: #{tpu_custom_call.1} parent=39 // pred_check
          %p231 = pneg %p36
        $region42: #{tpu_custom_call.1} parent=39 // pred_check_branch
          %233 = sbr.rel (%p231) target = $region44
        $region43: #{tpu_custom_call.1} parent=39 // pred_region
          %p234 = scmp.lt.s32.totalorder %s16, 1
          %s235 = scalar_select %p234, %s16, 1
          %s236 = smul.addr %s235, 2
          %s237 = smul.addr %s236, 4
          %s238 = scalar_lea.vmem %s0, %s237
        $region44: #{tpu_custom_call.1} parent=39 // pred_fallthru
          _
      $region40: #{tpu_custom_call.1} parent=5 // pred_fallthru
        _
      %p239 = scmp.le.s32.totalorder 1, %s16
      %p240 = scmp.lt.s32.totalorder %s16, 3
      %p241 = pnand %p239, %p240
      %p242 = pneg %p241
      // Predicated region
      $region45: #{tpu_custom_call.1} parent=5 // pred_check
        _
      $region46: #{tpu_custom_call.1} parent=5 // pred_check_branch
        %244 = sbr.rel (%p241) target = $region48
      $region47: #{tpu_custom_call.1} parent=5 // pred_region
        %s245 = ssub.s32 %s16, 1
        %p246 = scmp.lt.s32.totalorder %s21, 1
        %s247 = scalar_select %p246, %s21, 1
        %s248 = smul.addr %s247, 2
        %s249 = smul.addr %s248, 4
        %s250 = scalar_lea.vmem %s0, %s249
        %p251 = pneg %p42
        %p252 = pneg %p39
        %p253 = pneg %p63
        %p254 = pneg %p60
        %p255 = pneg %p84
        %p256 = pneg %p81
        %p257 = pneg %p105
        %p258 = pneg %p102
        %p259 = pneg %p126
        %p260 = pneg %p123
        %p261 = pneg %p147
        %p262 = pneg %p144
        %p263 = pneg %p168
        %p264 = pneg %p165
        %p265 = pneg %p194
        %p266 = pneg %p191
        %s267 = sand.u32 %s181, 1
        %s268 = scalar_lea.sflag [#allocation3], %s267
        %s269 = sand.u32 %s181, 1
        %s270 = smul.addr %s269, 8
        %s271 = scalar_lea.vmem [#allocation2], %s270
        %p272 = scmp.lt.s32.totalorder %s21, 1
        %s273 = scalar_select %p272, %s21, 1
        %s274 = smul.addr %s273, 2
        %s275 = smul.addr %s274, 4
        %s276 = scalar_lea.vmem %s0, %s275
        %v277 = vld [vmem:[%s1] sm:$0xff]
        %v278 = vld [vmem:[%s1 + $0x8] sm:$0xff]
        %v279 = vld [vmem:[%s2] sm:$0xff]
        %v280 = vld [vmem:[%s2 + $0x8] sm:$0xff]
        %v281 = vld [vmem:[%s3] sm:$0xff]
        %v282 = vld [vmem:[%s3 + $0x8] sm:$0xff]
        %v283 = vld [vmem:[%s4] sm:$0xff]
        %v284 = vld [vmem:[%s4 + $0x8] sm:$0xff]
        %v285 = vld [vmem:[%s5] sm:$0xf]
        %v286 = vld [vmem:[%s6] sm:$0xf]
        %v287 = vlaneseq
        %v288 = vand.u32 %v287, 127
        %v289 = vadd.s32 %v288, 128
        %v290 = vand.u32 %v288, 15
        %v291 = vand.u32 %v289, 15
        %v292 = vshra.s32 %v288, 4
        %v293 = vshra.s32 %v289, 4
        %vm294 = vcmp.ge.s32.totalorder %v290, 1
        %vm295 = vcmp.ge.s32.totalorder %v291, 1
        %vm296 = vcmp.lt.s32.totalorder %v290, 15
        %vm297 = vcmp.lt.s32.totalorder %v291, 15
        %vm298 = vcmp.ge.s32.totalorder %v292, 1
        %vm299 = vcmp.ge.s32.totalorder %v293, 1
        %vm300 = vcmp.lt.s32.totalorder %v292, 15
        %vm301 = vcmp.lt.s32.totalorder %v293, 15
        %vm302 = vmand %vm294, %vm298
        %vm303 = vmand %vm295, %vm299
        %vm304 = vmand %vm296, %vm298
        %vm305 = vmand %vm297, %vm299
        %vm306 = vmand %vm294, %vm300
        %vm307 = vmand %vm295, %vm301
        %vm308 = vmand %vm296, %vm300
        %vm309 = vmand %vm297, %vm301
        %v310 = vld [vmem:[%s276] sm:$0xff]
        %312 = vset.pattern.permute.xlu0 0
        %313 = vperm.xlu0 %312, %v277
        %v314 = vpop.permute.xlu0 %313
        %317 = vset.pattern.permute.xlu0 0
        %318 = vperm.xlu0 %317, %v278
        %v319 = vpop.permute.xlu0 %318
        %v322 = vlaneseq
        %v323 = vshrl.u32 %v322, 7
        %v324 = vsub.s32 0, %v323
        %v325 = vrot.slane %v310, %v324
        %v326 = vlaneseq
        %v327 = vshrl.u32 %v326, 7
        %v328 = vsub.s32 4, %v327
        %v329 = vrot.slane %v310, %v328
        %v332 = vlaneseq
        %v333 = vshrl.u32 %v332, 7
        %v334 = vsub.s32 0, %v333
        %v335 = vrot.slane %v325, %v334
        %v336 = vlaneseq
        %v337 = vshrl.u32 %v336, 7
        %v338 = vsub.s32 0, %v337
        %v339 = vrot.slane %v329, %v338
        %v340 = vmul.f32 %v314, %v335
        %v341 = vmul.f32 %v314, %v339
        %v342 = vmul.f32 %v319, %v335
        %v343 = vmul.f32 %v319, %v339
        %344 = vset.pattern.permute.xlu0 1
        %345 = vperm.xlu0 %344, %v277
        %v346 = vpop.permute.xlu0 %345
        %348 = vset.pattern.permute.xlu0 1
        %349 = vperm.xlu0 %348, %v278
        %v350 = vpop.permute.xlu0 %349
        %v352 = vlaneseq
        %v353 = vshrl.u32 %v352, 7
        %v354 = vsub.s32 1, %v353
        %v355 = vrot.slane %v310, %v354
        %v356 = vlaneseq
        %v357 = vshrl.u32 %v356, 7
        %v358 = vsub.s32 5, %v357
        %v359 = vrot.slane %v310, %v358
        %v362 = vlaneseq
        %v363 = vshrl.u32 %v362, 7
        %v364 = vsub.s32 1, %v363
        %v365 = vrot.slane %v355, %v364
        %v366 = vlaneseq
        %v367 = vshrl.u32 %v366, 7
        %v368 = vsub.s32 1, %v367
        %v369 = vrot.slane %v359, %v368
        %v370 = vmul.f32 %v346, %v365
        %v371 = vmul.f32 %v346, %v369
        %v372 = vmul.f32 %v350, %v365
        %v373 = vmul.f32 %v350, %v369
        %v374 = vadd.f32 %v340, %v370
        %v375 = vadd.f32 %v341, %v371
        %v376 = vadd.f32 %v342, %v372
        %v377 = vadd.f32 %v343, %v373
        %378 = vset.pattern.permute.xlu0 2
        %379 = vperm.xlu0 %378, %v277
        %v380 = vpop.permute.xlu0 %379
        %382 = vset.pattern.permute.xlu0 2
        %383 = vperm.xlu0 %382, %v278
        %v384 = vpop.permute.xlu0 %383
        %v386 = vlaneseq
        %v387 = vshrl.u32 %v386, 7
        %v388 = vsub.s32 2, %v387
        %v389 = vrot.slane %v310, %v388
        %v390 = vlaneseq
        %v391 = vshrl.u32 %v390, 7
        %v392 = vsub.s32 6, %v391
        %v393 = vrot.slane %v310, %v392
        %v396 = vlaneseq
        %v397 = vshrl.u32 %v396, 7
        %v398 = vsub.s32 2, %v397
        %v399 = vrot.slane %v389, %v398
        %v400 = vlaneseq
        %v401 = vshrl.u32 %v400, 7
        %v402 = vsub.s32 2, %v401
        %v403 = vrot.slane %v393, %v402
        %v404 = vmul.f32 %v380, %v399
        %v405 = vmul.f32 %v380, %v403
        %v406 = vmul.f32 %v384, %v399
        %v407 = vmul.f32 %v384, %v403
        %v408 = vadd.f32 %v374, %v404
        %v409 = vadd.f32 %v375, %v405
        %v410 = vadd.f32 %v376, %v406
        %v411 = vadd.f32 %v377, %v407
        %412 = vset.pattern.permute.xlu0 3
        %413 = vperm.xlu0 %412, %v277
        %v414 = vpop.permute.xlu0 %413
        %416 = vset.pattern.permute.xlu0 3
        %417 = vperm.xlu0 %416, %v278
        %v418 = vpop.permute.xlu0 %417
        %v420 = vlaneseq
        %v421 = vshrl.u32 %v420, 7
        %v422 = vsub.s32 3, %v421
        %v423 = vrot.slane %v310, %v422
        %v424 = vlaneseq
        %v425 = vshrl.u32 %v424, 7
        %v426 = vsub.s32 7, %v425
        %v427 = vrot.slane %v310, %v426
        %v430 = vlaneseq
        %v431 = vshrl.u32 %v430, 7
        %v432 = vsub.s32 3, %v431
        %v433 = vrot.slane %v423, %v432
        %v434 = vlaneseq
        %v435 = vshrl.u32 %v434, 7
        %v436 = vsub.s32 3, %v435
        %v437 = vrot.slane %v427, %v436
        %v438 = vmul.f32 %v414, %v433
        %v439 = vmul.f32 %v414, %v437
        %v440 = vmul.f32 %v418, %v433
        %v441 = vmul.f32 %v418, %v437
        %v442 = vadd.f32 %v408, %v438
        %v443 = vadd.f32 %v409, %v439
        %v444 = vadd.f32 %v410, %v440
        %v445 = vadd.f32 %v411, %v441
        %447 = vset.pattern.permute.xlu0 0
        %448 = vperm.xlu0 %447, %v279
        %v449 = vpop.permute.xlu0 %448
        %452 = vset.pattern.permute.xlu0 0
        %453 = vperm.xlu0 %452, %v280
        %v454 = vpop.permute.xlu0 %453
        %v456 = vadd.f32 %v442, %v449
        %v457 = vadd.f32 %v443, %v449
        %v458 = vadd.f32 %v444, %v454
        %v459 = vadd.f32 %v445, %v454
        %v460 = vand.u32 2147483647, %v456
        %v461 = vand.u32 2147483647, %v457
        %v462 = vand.u32 2147483647, %v458
        %v463 = vand.u32 2147483647, %v459
        %v464 = vmul.f32 %v460, 0.70710677
        %v465 = vmul.f32 %v461, 0.70710677
        %v466 = vmul.f32 %v462, 0.70710677
        %v467 = vmul.f32 %v463, 0.70710677
        %v468 = vmul.f32 %v464, 0.3275911
        %v469 = vmul.f32 %v465, 0.3275911
        %v470 = vmul.f32 %v466, 0.3275911
        %v471 = vmul.f32 %v467, 0.3275911
        %v472 = vadd.f32 %v468, 1.0
        %v473 = vadd.f32 %v469, 1.0
        %v474 = vadd.f32 %v470, 1.0
        %v475 = vadd.f32 %v471, 1.0
        %v476 = vrcp.pop %v472
        %v477 = vrcp.pop %v473
        %v478 = vrcp.pop %v474
        %v479 = vrcp.pop %v475
        %v480 = vmul.f32 %v476, 1.0614054
        %v481 = vmul.f32 %v477, 1.0614054
        %v482 = vmul.f32 %v478, 1.0614054
        %v483 = vmul.f32 %v479, 1.0614054
        %v484 = vadd.f32 %v480, -1.4531521
        %v485 = vadd.f32 %v481, -1.4531521
        %v486 = vadd.f32 %v482, -1.4531521
        %v487 = vadd.f32 %v483, -1.4531521
        %v488 = vmul.f32 %v476, %v484
        %v489 = vmul.f32 %v477, %v485
        %v490 = vmul.f32 %v478, %v486
        %v491 = vmul.f32 %v479, %v487
        %v492 = vadd.f32 %v488, 1.4214138
        %v493 = vadd.f32 %v489, 1.4214138
        %v494 = vadd.f32 %v490, 1.4214138
        %v495 = vadd.f32 %v491, 1.4214138
        %v496 = vmul.f32 %v476, %v492
        %v497 = vmul.f32 %v477, %v493
        %v498 = vmul.f32 %v478, %v494
        %v499 = vmul.f32 %v479, %v495
        %v500 = vadd.f32 %v496, -0.28449672
        %v501 = vadd.f32 %v497, -0.28449672
        %v502 = vadd.f32 %v498, -0.28449672
        %v503 = vadd.f32 %v499, -0.28449672
        %v504 = vmul.f32 %v476, %v500
        %v505 = vmul.f32 %v477, %v501
        %v506 = vmul.f32 %v478, %v502
        %v507 = vmul.f32 %v479, %v503
        %v508 = vadd.f32 %v504, 0.2548296
        %v509 = vadd.f32 %v505, 0.2548296
        %v510 = vadd.f32 %v506, 0.2548296
        %v511 = vadd.f32 %v507, 0.2548296
        %v512 = vmul.f32 %v476, %v508
        %v513 = vmul.f32 %v477, %v509
        %v514 = vmul.f32 %v478, %v510
        %v515 = vmul.f32 %v479, %v511
        %v516 = vmul.f32 %v456, 0.5
        %v517 = vmul.f32 %v457, 0.5
        %v518 = vmul.f32 %v458, 0.5
        %v519 = vmul.f32 %v459, 0.5
        %v520 = vmul.f32 %v516, %v512
        %v521 = vmul.f32 %v517, %v513
        %v522 = vmul.f32 %v518, %v514
        %v523 = vmul.f32 %v519, %v515
        %v524 = vsub.f32 0.0, %v464
        %v525 = vsub.f32 0.0, %v465
        %v526 = vsub.f32 0.0, %v466
        %v527 = vsub.f32 0.0, %v467
        %v528 = vmul.f32 %v524, %v464
        %v529 = vmul.f32 %v525, %v465
        %v530 = vmul.f32 %v526, %v466
        %v531 = vmul.f32 %v527, %v467
        %v532 = vmul.f32 %v528, 1.442695
        %v533 = vpow.pop %v532
        %v534 = vmul.f32 %v529, 1.442695
        %v535 = vpow.pop %v534
        %v536 = vmul.f32 %v530, 1.442695
        %v537 = vpow.pop %v536
        %v538 = vmul.f32 %v531, 1.442695
        %v539 = vpow.pop %v538
        %v540 = vmul.f32 %v520, %v533
        %v541 = vmul.f32 %v521, %v535
        %v542 = vmul.f32 %v522, %v537
        %v543 = vmul.f32 %v523, %v539
        %vm544 = vcmp.ge.f32.partialorder %v456, 0.0
        %vm545 = vcmp.ge.f32.partialorder %v457, 0.0
        %vm546 = vcmp.ge.f32.partialorder %v458, 0.0
        %vm547 = vcmp.ge.f32.partialorder %v459, 0.0
        %v548 = vsub.f32 %v456, %v540
        %v549 = vsub.f32 %v457, %v541
        %v550 = vsub.f32 %v458, %v542
        %v551 = vsub.f32 %v459, %v543
        %v552 = vsel %vm544, %v548, %v540
        %v553 = vsel %vm545, %v549, %v541
        %v554 = vsel %vm546, %v550, %v542
        %v555 = vsel %vm547, %v551, %v543
        %557 = vset.pattern.permute.xlu0 4
        %558 = vperm.xlu0 %557, %v281
        %v559 = vpop.permute.xlu0 %558
        %562 = vset.pattern.permute.xlu0 4
        %563 = vperm.xlu0 %562, %v282
        %v564 = vpop.permute.xlu0 %563
        %v566 = vmul.f32 %v559, %v552
        %v567 = vmul.f32 %v559, %v553
        %v568 = vmul.f32 %v564, %v554
        %v569 = vmul.f32 %v564, %v555
        %570 = vrot.lane.b32.xlu0 %v552, 17
        %v571 = vpop.permute.xlu0 %570
        %572 = vrot.lane.b32.xlu0 %v554, 17
        %v573 = vpop.permute.xlu0 %572
        %574 = vrot.lane.b32.xlu0 %v553, 17
        %v575 = vpop.permute.xlu0 %574
        %576 = vrot.lane.b32.xlu0 %v555, 17
        %v577 = vpop.permute.xlu0 %576
        %vm578 = vcmp.lt.s32.totalorder %v288, 17
        %v579 = vsel %vm578, %v571, %v575
        %v580 = vsel %vm578, %v573, %v577
        %v581 = vsel %vm578, %v575, %v571
        %v582 = vsel %vm578, %v577, %v573
        %v583 = vsel %vm302, 1, 0
        %v584 = vsel %vm303, 1, 0
        %vm585 = vcmp.eq.s32.totalorder %v583, 1
        %vm586 = vcmp.eq.s32.totalorder %v584, 1
        %v587 = vsel %vm585, %v581, 0.0
        %v588 = vsel %vm586, %v579, 0.0
        %v589 = vsel %vm585, %v582, 0.0
        %v590 = vsel %vm586, %v580, 0.0
        %591 = vset.pattern.permute.xlu0 0
        %592 = vperm.xlu0 %591, %v281
        %v593 = vpop.permute.xlu0 %592
        %595 = vset.pattern.permute.xlu0 0
        %596 = vperm.xlu0 %595, %v282
        %v597 = vpop.permute.xlu0 %596
        %v599 = vmul.f32 %v593, %v587
        %v600 = vmul.f32 %v593, %v588
        %v601 = vmul.f32 %v597, %v589
        %v602 = vmul.f32 %v597, %v590
        %v603 = vadd.f32 %v566, %v599
        %v604 = vadd.f32 %v567, %v600
        %v605 = vadd.f32 %v568, %v601
        %v606 = vadd.f32 %v569, %v602
        %607 = vrot.lane.b32.xlu0 %v552, 16
        %v608 = vpop.permute.xlu0 %607
        %609 = vrot.lane.b32.xlu0 %v554, 16
        %v610 = vpop.permute.xlu0 %609
        %611 = vrot.lane.b32.xlu0 %v553, 16
        %v612 = vpop.permute.xlu0 %611
        %613 = vrot.lane.b32.xlu0 %v555, 16
        %v614 = vpop.permute.xlu0 %613
        %vm615 = vcmp.lt.s32.totalorder %v288, 16
        %v616 = vsel %vm615, %v608, %v612
        %v617 = vsel %vm615, %v610, %v614
        %v618 = vsel %vm615, %v612, %v608
        %v619 = vsel %vm615, %v614, %v610
        %v620 = vsel %vm298, 1, 0
        %v621 = vsel %vm299, 1, 0
        %vm622 = vcmp.eq.s32.totalorder %v620, 1
        %vm623 = vcmp.eq.s32.totalorder %v621, 1
        %v624 = vsel %vm622, %v618, 0.0
        %v625 = vsel %vm623, %v616, 0.0
        %v626 = vsel %vm622, %v619, 0.0
        %v627 = vsel %vm623, %v617, 0.0
        %628 = vset.pattern.permute.xlu0 1
        %629 = vperm.xlu0 %628, %v281
        %v630 = vpop.permute.xlu0 %629
        %632 = vset.pattern.permute.xlu0 1
        %633 = vperm.xlu0 %632, %v282
        %v634 = vpop.permute.xlu0 %633
        %v636 = vmul.f32 %v630, %v624
        %v637 = vmul.f32 %v630, %v625
        %v638 = vmul.f32 %v634, %v626
        %v639 = vmul.f32 %v634, %v627
        %v640 = vadd.f32 %v603, %v636
        %v641 = vadd.f32 %v604, %v637
        %v642 = vadd.f32 %v605, %v638
        %v643 = vadd.f32 %v606, %v639
        %644 = vrot.lane.b32.xlu0 %v552, 15
        %v645 = vpop.permute.xlu0 %644
        %646 = vrot.lane.b32.xlu0 %v554, 15
        %v647 = vpop.permute.xlu0 %646
        %648 = vrot.lane.b32.xlu0 %v553, 15
        %v649 = vpop.permute.xlu0 %648
        %650 = vrot.lane.b32.xlu0 %v555, 15
        %v651 = vpop.permute.xlu0 %650
        %vm652 = vcmp.lt.s32.totalorder %v288, 15
        %v653 = vsel %vm652, %v645, %v649
        %v654 = vsel %vm652, %v647, %v651
        %v655 = vsel %vm652, %v649, %v645
        %v656 = vsel %vm652, %v651, %v647
        %v657 = vsel %vm304, 1, 0
        %v658 = vsel %vm305, 1, 0
        %vm659 = vcmp.eq.s32.totalorder %v657, 1
        %vm660 = vcmp.eq.s32.totalorder %v658, 1
        %v661 = vsel %vm659, %v655, 0.0
        %v662 = vsel %vm660, %v653, 0.0
        %v663 = vsel %vm659, %v656, 0.0
        %v664 = vsel %vm660, %v654, 0.0
        %665 = vset.pattern.permute.xlu0 2
        %666 = vperm.xlu0 %665, %v281
        %v667 = vpop.permute.xlu0 %666
        %669 = vset.pattern.permute.xlu0 2
        %670 = vperm.xlu0 %669, %v282
        %v671 = vpop.permute.xlu0 %670
        %v673 = vmul.f32 %v667, %v661
        %v674 = vmul.f32 %v667, %v662
        %v675 = vmul.f32 %v671, %v663
        %v676 = vmul.f32 %v671, %v664
        %v677 = vadd.f32 %v640, %v673
        %v678 = vadd.f32 %v641, %v674
        %v679 = vadd.f32 %v642, %v675
        %v680 = vadd.f32 %v643, %v676
        %681 = vrot.lane.b32.xlu0 %v552, 1
        %v682 = vpop.permute.xlu0 %681
        %683 = vrot.lane.b32.xlu0 %v554, 1
        %v684 = vpop.permute.xlu0 %683
        %685 = vrot.lane.b32.xlu0 %v553, 1
        %v686 = vpop.permute.xlu0 %685
        %687 = vrot.lane.b32.xlu0 %v555, 1
        %v688 = vpop.permute.xlu0 %687
        %vm689 = vcmp.lt.s32.totalorder %v288, 1
        %v690 = vsel %vm689, %v682, %v686
        %v691 = vsel %vm689, %v684, %v688
        %v692 = vsel %vm689, %v686, %v682
        %v693 = vsel %vm689, %v688, %v684
        %v694 = vsel %vm294, 1, 0
        %v695 = vsel %vm295, 1, 0
        %vm696 = vcmp.eq.s32.totalorder %v694, 1
        %vm697 = vcmp.eq.s32.totalorder %v695, 1
        %v698 = vsel %vm696, %v692, 0.0
        %v699 = vsel %vm697, %v690, 0.0
        %v700 = vsel %vm696, %v693, 0.0
        %v701 = vsel %vm697, %v691, 0.0
        %702 = vset.pattern.permute.xlu0 3
        %703 = vperm.xlu0 %702, %v281
        %v704 = vpop.permute.xlu0 %703
        %706 = vset.pattern.permute.xlu0 3
        %707 = vperm.xlu0 %706, %v282
        %v708 = vpop.permute.xlu0 %707
        %v710 = vmul.f32 %v704, %v698
        %v711 = vmul.f32 %v704, %v699
        %v712 = vmul.f32 %v708, %v700
        %v713 = vmul.f32 %v708, %v701
        %v714 = vadd.f32 %v677, %v710
        %v715 = vadd.f32 %v678, %v711
        %v716 = vadd.f32 %v679, %v712
        %v717 = vadd.f32 %v680, %v713
        %718 = vrot.lane.b32.xlu0 %v552, 127
        %v719 = vpop.permute.xlu0 %718
        %720 = vrot.lane.b32.xlu0 %v554, 127
        %v721 = vpop.permute.xlu0 %720
        %722 = vrot.lane.b32.xlu0 %v553, 127
        %v723 = vpop.permute.xlu0 %722
        %724 = vrot.lane.b32.xlu0 %v555, 127
        %v725 = vpop.permute.xlu0 %724
        %vm726 = vcmp.lt.s32.totalorder %v288, 127
        %v727 = vsel %vm726, %v719, %v723
        %v728 = vsel %vm726, %v721, %v725
        %v729 = vsel %vm726, %v723, %v719
        %v730 = vsel %vm726, %v725, %v721
        %v731 = vsel %vm296, 1, 0
        %v732 = vsel %vm297, 1, 0
        %vm733 = vcmp.eq.s32.totalorder %v731, 1
        %vm734 = vcmp.eq.s32.totalorder %v732, 1
        %v735 = vsel %vm733, %v727, 0.0
        %v736 = vsel %vm734, %v729, 0.0
        %v737 = vsel %vm733, %v728, 0.0
        %v738 = vsel %vm734, %v730, 0.0
        %739 = vset.pattern.permute.xlu0 5
        %740 = vperm.xlu0 %739, %v281
        %v741 = vpop.permute.xlu0 %740
        %743 = vset.pattern.permute.xlu0 5
        %744 = vperm.xlu0 %743, %v282
        %v745 = vpop.permute.xlu0 %744
        %v747 = vmul.f32 %v741, %v735
        %v748 = vmul.f32 %v741, %v736
        %v749 = vmul.f32 %v745, %v737
        %v750 = vmul.f32 %v745, %v738
        %v751 = vadd.f32 %v714, %v747
        %v752 = vadd.f32 %v715, %v748
        %v753 = vadd.f32 %v716, %v749
        %v754 = vadd.f32 %v717, %v750
        %755 = vrot.lane.b32.xlu0 %v552, 113
        %v756 = vpop.permute.xlu0 %755
        %757 = vrot.lane.b32.xlu0 %v554, 113
        %v758 = vpop.permute.xlu0 %757
        %759 = vrot.lane.b32.xlu0 %v553, 113
        %v760 = vpop.permute.xlu0 %759
        %761 = vrot.lane.b32.xlu0 %v555, 113
        %v762 = vpop.permute.xlu0 %761
        %vm763 = vcmp.lt.s32.totalorder %v288, 113
        %v764 = vsel %vm763, %v756, %v760
        %v765 = vsel %vm763, %v758, %v762
        %v766 = vsel %vm763, %v760, %v756
        %v767 = vsel %vm763, %v762, %v758
        %v768 = vsel %vm306, 1, 0
        %v769 = vsel %vm307, 1, 0
        %vm770 = vcmp.eq.s32.totalorder %v768, 1
        %vm771 = vcmp.eq.s32.totalorder %v769, 1
        %v772 = vsel %vm770, %v764, 0.0
        %v773 = vsel %vm771, %v766, 0.0
        %v774 = vsel %vm770, %v765, 0.0
        %v775 = vsel %vm771, %v767, 0.0
        %776 = vset.pattern.permute.xlu0 6
        %777 = vperm.xlu0 %776, %v281
        %v778 = vpop.permute.xlu0 %777
        %780 = vset.pattern.permute.xlu0 6
        %781 = vperm.xlu0 %780, %v282
        %v782 = vpop.permute.xlu0 %781
        %v784 = vmul.f32 %v778, %v772
        %v785 = vmul.f32 %v778, %v773
        %v786 = vmul.f32 %v782, %v774
        %v787 = vmul.f32 %v782, %v775
        %v788 = vadd.f32 %v751, %v784
        %v789 = vadd.f32 %v752, %v785
        %v790 = vadd.f32 %v753, %v786
        %v791 = vadd.f32 %v754, %v787
        %792 = vrot.lane.b32.xlu0 %v552, 112
        %v793 = vpop.permute.xlu0 %792
        %794 = vrot.lane.b32.xlu0 %v554, 112
        %v795 = vpop.permute.xlu0 %794
        %796 = vrot.lane.b32.xlu0 %v553, 112
        %v797 = vpop.permute.xlu0 %796
        %798 = vrot.lane.b32.xlu0 %v555, 112
        %v799 = vpop.permute.xlu0 %798
        %vm800 = vcmp.lt.s32.totalorder %v288, 112
        %v801 = vsel %vm800, %v793, %v797
        %v802 = vsel %vm800, %v795, %v799
        %v803 = vsel %vm800, %v797, %v793
        %v804 = vsel %vm800, %v799, %v795
        %v805 = vsel %vm300, 1, 0
        %v806 = vsel %vm301, 1, 0
        %vm807 = vcmp.eq.s32.totalorder %v805, 1
        %vm808 = vcmp.eq.s32.totalorder %v806, 1
        %v809 = vsel %vm807, %v801, 0.0
        %v810 = vsel %vm808, %v803, 0.0
        %v811 = vsel %vm807, %v802, 0.0
        %v812 = vsel %vm808, %v804, 0.0
        %813 = vset.pattern.permute.xlu0 7
        %814 = vperm.xlu0 %813, %v281
        %v815 = vpop.permute.xlu0 %814
        %817 = vset.pattern.permute.xlu0 7
        %818 = vperm.xlu0 %817, %v282
        %v819 = vpop.permute.xlu0 %818
        %v821 = vmul.f32 %v815, %v809
        %v822 = vmul.f32 %v815, %v810
        %v823 = vmul.f32 %v819, %v811
        %v824 = vmul.f32 %v819, %v812
        %v825 = vadd.f32 %v788, %v821
        %v826 = vadd.f32 %v789, %v822
        %v827 = vadd.f32 %v790, %v823
        %v828 = vadd.f32 %v791, %v824
        %829 = vrot.lane.b32.xlu0 %v552, 111
        %v830 = vpop.permute.xlu0 %829
        %831 = vrot.lane.b32.xlu0 %v554, 111
        %v832 = vpop.permute.xlu0 %831
        %833 = vrot.lane.b32.xlu0 %v553, 111
        %v834 = vpop.permute.xlu0 %833
        %835 = vrot.lane.b32.xlu0 %v555, 111
        %v836 = vpop.permute.xlu0 %835
        %vm837 = vcmp.lt.s32.totalorder %v288, 111
        %v838 = vsel %vm837, %v830, %v834
        %v839 = vsel %vm837, %v832, %v836
        %v840 = vsel %vm837, %v834, %v830
        %v841 = vsel %vm837, %v836, %v832
        %v842 = vsel %vm308, 1, 0
        %v843 = vsel %vm309, 1, 0
        %vm844 = vcmp.eq.s32.totalorder %v842, 1
        %vm845 = vcmp.eq.s32.totalorder %v843, 1
        %v846 = vsel %vm844, %v838, 0.0
        %v847 = vsel %vm845, %v840, 0.0
        %v848 = vsel %vm844, %v839, 0.0
        %v849 = vsel %vm845, %v841, 0.0
        %850 = vset.pattern.permute.xlu0 8
        %851 = vperm.xlu0 %850, %v281
        %v852 = vpop.permute.xlu0 %851
        %854 = vset.pattern.permute.xlu0 8
        %855 = vperm.xlu0 %854, %v282
        %v856 = vpop.permute.xlu0 %855
        %v858 = vmul.f32 %v852, %v846
        %v859 = vmul.f32 %v852, %v847
        %v860 = vmul.f32 %v856, %v848
        %v861 = vmul.f32 %v856, %v849
        %v862 = vadd.f32 %v825, %v858
        %v863 = vadd.f32 %v826, %v859
        %v864 = vadd.f32 %v827, %v860
        %v865 = vadd.f32 %v828, %v861
        %867 = vset.pattern.permute.xlu0 0
        %868 = vperm.xlu0 %867, %v283
        %v869 = vpop.permute.xlu0 %868
        %872 = vset.pattern.permute.xlu0 0
        %873 = vperm.xlu0 %872, %v284
        %v874 = vpop.permute.xlu0 %873
        %v876 = vadd.f32 %v862, %v869
        %v877 = vadd.f32 %v863, %v869
        %v878 = vadd.f32 %v864, %v874
        %v879 = vadd.f32 %v865, %v874
        %v880 = vand.u32 2147483647, %v876
        %v881 = vand.u32 2147483647, %v877
        %v882 = vand.u32 2147483647, %v878
        %v883 = vand.u32 2147483647, %v879
        %v884 = vmul.f32 %v880, 0.70710677
        %v885 = vmul.f32 %v881, 0.70710677
        %v886 = vmul.f32 %v882, 0.70710677
        %v887 = vmul.f32 %v883, 0.70710677
        %v888 = vmul.f32 %v884, 0.3275911
        %v889 = vmul.f32 %v885, 0.3275911
        %v890 = vmul.f32 %v886, 0.3275911
        %v891 = vmul.f32 %v887, 0.3275911
        %v892 = vadd.f32 %v888, 1.0
        %v893 = vadd.f32 %v889, 1.0
        %v894 = vadd.f32 %v890, 1.0
        %v895 = vadd.f32 %v891, 1.0
        %v896 = vrcp.pop %v892
        %v897 = vrcp.pop %v893
        %v898 = vrcp.pop %v894
        %v899 = vrcp.pop %v895
        %v900 = vmul.f32 %v896, 1.0614054
        %v901 = vmul.f32 %v897, 1.0614054
        %v902 = vmul.f32 %v898, 1.0614054
        %v903 = vmul.f32 %v899, 1.0614054
        %v904 = vadd.f32 %v900, -1.4531521
        %v905 = vadd.f32 %v901, -1.4531521
        %v906 = vadd.f32 %v902, -1.4531521
        %v907 = vadd.f32 %v903, -1.4531521
        %v908 = vmul.f32 %v896, %v904
        %v909 = vmul.f32 %v897, %v905
        %v910 = vmul.f32 %v898, %v906
        %v911 = vmul.f32 %v899, %v907
        %v912 = vadd.f32 %v908, 1.4214138
        %v913 = vadd.f32 %v909, 1.4214138
        %v914 = vadd.f32 %v910, 1.4214138
        %v915 = vadd.f32 %v911, 1.4214138
        %v916 = vmul.f32 %v896, %v912
        %v917 = vmul.f32 %v897, %v913
        %v918 = vmul.f32 %v898, %v914
        %v919 = vmul.f32 %v899, %v915
        %v920 = vadd.f32 %v916, -0.28449672
        %v921 = vadd.f32 %v917, -0.28449672
        %v922 = vadd.f32 %v918, -0.28449672
        %v923 = vadd.f32 %v919, -0.28449672
        %v924 = vmul.f32 %v896, %v920
        %v925 = vmul.f32 %v897, %v921
        %v926 = vmul.f32 %v898, %v922
        %v927 = vmul.f32 %v899, %v923
        %v928 = vadd.f32 %v924, 0.2548296
        %v929 = vadd.f32 %v925, 0.2548296
        %v930 = vadd.f32 %v926, 0.2548296
        %v931 = vadd.f32 %v927, 0.2548296
        %v932 = vmul.f32 %v896, %v928
        %v933 = vmul.f32 %v897, %v929
        %v934 = vmul.f32 %v898, %v930
        %v935 = vmul.f32 %v899, %v931
        %v936 = vmul.f32 %v876, 0.5
        %v937 = vmul.f32 %v877, 0.5
        %v938 = vmul.f32 %v878, 0.5
        %v939 = vmul.f32 %v879, 0.5
        %v940 = vmul.f32 %v936, %v932
        %v941 = vmul.f32 %v937, %v933
        %v942 = vmul.f32 %v938, %v934
        %v943 = vmul.f32 %v939, %v935
        %v944 = vsub.f32 0.0, %v884
        %v945 = vsub.f32 0.0, %v885
        %v946 = vsub.f32 0.0, %v886
        %v947 = vsub.f32 0.0, %v887
        %v948 = vmul.f32 %v944, %v884
        %v949 = vmul.f32 %v945, %v885
        %v950 = vmul.f32 %v946, %v886
        %v951 = vmul.f32 %v947, %v887
        %v952 = vmul.f32 %v948, 1.442695
        %v953 = vpow.pop %v952
        %v954 = vmul.f32 %v949, 1.442695
        %v955 = vpow.pop %v954
        %v956 = vmul.f32 %v950, 1.442695
        %v957 = vpow.pop %v956
        %v958 = vmul.f32 %v951, 1.442695
        %v959 = vpow.pop %v958
        %v960 = vmul.f32 %v940, %v953
        %v961 = vmul.f32 %v941, %v955
        %v962 = vmul.f32 %v942, %v957
        %v963 = vmul.f32 %v943, %v959
        %vm964 = vcmp.ge.f32.partialorder %v876, 0.0
        %vm965 = vcmp.ge.f32.partialorder %v877, 0.0
        %vm966 = vcmp.ge.f32.partialorder %v878, 0.0
        %vm967 = vcmp.ge.f32.partialorder %v879, 0.0
        %v968 = vsub.f32 %v876, %v960
        %v969 = vsub.f32 %v877, %v961
        %v970 = vsub.f32 %v878, %v962
        %v971 = vsub.f32 %v879, %v963
        %v972 = vsel %vm964, %v968, %v960
        %v973 = vsel %vm965, %v969, %v961
        %v974 = vsel %vm966, %v970, %v962
        %v975 = vsel %vm967, %v971, %v963
        %v976 = vadd.f32 %v552, %v972
        %v977 = vadd.f32 %v553, %v973
        %v978 = vadd.f32 %v554, %v974
        %v979 = vadd.f32 %v555, %v975
        %981 = vset.pattern.permute.xlu0 0
        %982 = vperm.xlu0 %981, %v285
        %v983 = vpop.permute.xlu0 %982
        %v985 = vlaneseq
        %v986 = vshrl.u32 %v985, 7
        %v987 = vsub.s32 0, %v986
        %v988 = vrot.slane %v976, %v987
        %v989 = vlaneseq
        %v990 = vshrl.u32 %v989, 7
        %v991 = vsub.s32 0, %v990
        %v992 = vrot.slane %v977, %v991
        %v993 = vmul.f32 %v983, %v988
        %v994 = vmul.f32 %v983, %v992
        %995 = vset.pattern.permute.xlu0 1
        %996 = vperm.xlu0 %995, %v285
        %v997 = vpop.permute.xlu0 %996
        %v999 = vlaneseq
        %v1000 = vshrl.u32 %v999, 7
        %v1001 = vsub.s32 1, %v1000
        %v1002 = vrot.slane %v976, %v1001
        %v1003 = vlaneseq
        %v1004 = vshrl.u32 %v1003, 7
        %v1005 = vsub.s32 1, %v1004
        %v1006 = vrot.slane %v977, %v1005
        %v1007 = vmul.f32 %v997, %v1002
        %v1008 = vmul.f32 %v997, %v1006
        %v1009 = vadd.f32 %v993, %v1007
        %v1010 = vadd.f32 %v994, %v1008
        %1011 = vset.pattern.permute.xlu0 2
        %1012 = vperm.xlu0 %1011, %v285
        %v1013 = vpop.permute.xlu0 %1012
        %v1015 = vlaneseq
        %v1016 = vshrl.u32 %v1015, 7
        %v1017 = vsub.s32 2, %v1016
        %v1018 = vrot.slane %v976, %v1017
        %v1019 = vlaneseq
        %v1020 = vshrl.u32 %v1019, 7
        %v1021 = vsub.s32 2, %v1020
        %v1022 = vrot.slane %v977, %v1021
        %v1023 = vmul.f32 %v1013, %v1018
        %v1024 = vmul.f32 %v1013, %v1022
        %v1025 = vadd.f32 %v1009, %v1023
        %v1026 = vadd.f32 %v1010, %v1024
        %1027 = vset.pattern.permute.xlu0 3
        %1028 = vperm.xlu0 %1027, %v285
        %v1029 = vpop.permute.xlu0 %1028
        %v1031 = vlaneseq
        %v1032 = vshrl.u32 %v1031, 7
        %v1033 = vsub.s32 3, %v1032
        %v1034 = vrot.slane %v976, %v1033
        %v1035 = vlaneseq
        %v1036 = vshrl.u32 %v1035, 7
        %v1037 = vsub.s32 3, %v1036
        %v1038 = vrot.slane %v977, %v1037
        %v1039 = vmul.f32 %v1029, %v1034
        %v1040 = vmul.f32 %v1029, %v1038
        %v1041 = vadd.f32 %v1025, %v1039
        %v1042 = vadd.f32 %v1026, %v1040
        %1043 = vset.pattern.permute.xlu0 4
        %1044 = vperm.xlu0 %1043, %v285
        %v1045 = vpop.permute.xlu0 %1044
        %v1047 = vlaneseq
        %v1048 = vshrl.u32 %v1047, 7
        %v1049 = vsub.s32 4, %v1048
        %v1050 = vrot.slane %v976, %v1049
        %v1051 = vlaneseq
        %v1052 = vshrl.u32 %v1051, 7
        %v1053 = vsub.s32 4, %v1052
        %v1054 = vrot.slane %v977, %v1053
        %v1055 = vmul.f32 %v1045, %v1050
        %v1056 = vmul.f32 %v1045, %v1054
        %v1057 = vadd.f32 %v1041, %v1055
        %v1058 = vadd.f32 %v1042, %v1056
        %1059 = vset.pattern.permute.xlu0 5
        %1060 = vperm.xlu0 %1059, %v285
        %v1061 = vpop.permute.xlu0 %1060
        %v1063 = vlaneseq
        %v1064 = vshrl.u32 %v1063, 7
        %v1065 = vsub.s32 5, %v1064
        %v1066 = vrot.slane %v976, %v1065
        %v1067 = vlaneseq
        %v1068 = vshrl.u32 %v1067, 7
        %v1069 = vsub.s32 5, %v1068
        %v1070 = vrot.slane %v977, %v1069
        %v1071 = vmul.f32 %v1061, %v1066
        %v1072 = vmul.f32 %v1061, %v1070
        %v1073 = vadd.f32 %v1057, %v1071
        %v1074 = vadd.f32 %v1058, %v1072
        %1075 = vset.pattern.permute.xlu0 6
        %1076 = vperm.xlu0 %1075, %v285
        %v1077 = vpop.permute.xlu0 %1076
        %v1079 = vlaneseq
        %v1080 = vshrl.u32 %v1079, 7
        %v1081 = vsub.s32 6, %v1080
        %v1082 = vrot.slane %v976, %v1081
        %v1083 = vlaneseq
        %v1084 = vshrl.u32 %v1083, 7
        %v1085 = vsub.s32 6, %v1084
        %v1086 = vrot.slane %v977, %v1085
        %v1087 = vmul.f32 %v1077, %v1082
        %v1088 = vmul.f32 %v1077, %v1086
        %v1089 = vadd.f32 %v1073, %v1087
        %v1090 = vadd.f32 %v1074, %v1088
        %1091 = vset.pattern.permute.xlu0 7
        %1092 = vperm.xlu0 %1091, %v285
        %v1093 = vpop.permute.xlu0 %1092
        %v1095 = vlaneseq
        %v1096 = vshrl.u32 %v1095, 7
        %v1097 = vsub.s32 7, %v1096
        %v1098 = vrot.slane %v976, %v1097
        %v1099 = vlaneseq
        %v1100 = vshrl.u32 %v1099, 7
        %v1101 = vsub.s32 7, %v1100
        %v1102 = vrot.slane %v977, %v1101
        %v1103 = vmul.f32 %v1093, %v1098
        %v1104 = vmul.f32 %v1093, %v1102
        %v1105 = vadd.f32 %v1089, %v1103
        %v1106 = vadd.f32 %v1090, %v1104
        %1107 = vset.pattern.permute.xlu0 8
        %1108 = vperm.xlu0 %1107, %v285
        %v1109 = vpop.permute.xlu0 %1108
        %v1111 = vlaneseq
        %v1112 = vshrl.u32 %v1111, 7
        %v1113 = vsub.s32 0, %v1112
        %v1114 = vrot.slane %v978, %v1113
        %v1115 = vlaneseq
        %v1116 = vshrl.u32 %v1115, 7
        %v1117 = vsub.s32 0, %v1116
        %v1118 = vrot.slane %v979, %v1117
        %v1119 = vmul.f32 %v1109, %v1114
        %v1120 = vmul.f32 %v1109, %v1118
        %v1121 = vadd.f32 %v1105, %v1119
        %v1122 = vadd.f32 %v1106, %v1120
        %1123 = vset.pattern.permute.xlu0 9
        %1124 = vperm.xlu0 %1123, %v285
        %v1125 = vpop.permute.xlu0 %1124
        %v1127 = vlaneseq
        %v1128 = vshrl.u32 %v1127, 7
        %v1129 = vsub.s32 1, %v1128
        %v1130 = vrot.slane %v978, %v1129
        %v1131 = vlaneseq
        %v1132 = vshrl.u32 %v1131, 7
        %v1133 = vsub.s32 1, %v1132
        %v1134 = vrot.slane %v979, %v1133
        %v1135 = vmul.f32 %v1125, %v1130
        %v1136 = vmul.f32 %v1125, %v1134
        %v1137 = vadd.f32 %v1121, %v1135
        %v1138 = vadd.f32 %v1122, %v1136
        %1139 = vset.pattern.permute.xlu0 10
        %1140 = vperm.xlu0 %1139, %v285
        %v1141 = vpop.permute.xlu0 %1140
        %v1143 = vlaneseq
        %v1144 = vshrl.u32 %v1143, 7
        %v1145 = vsub.s32 2, %v1144
        %v1146 = vrot.slane %v978, %v1145
        %v1147 = vlaneseq
        %v1148 = vshrl.u32 %v1147, 7
        %v1149 = vsub.s32 2, %v1148
        %v1150 = vrot.slane %v979, %v1149
        %v1151 = vmul.f32 %v1141, %v1146
        %v1152 = vmul.f32 %v1141, %v1150
        %v1153 = vadd.f32 %v1137, %v1151
        %v1154 = vadd.f32 %v1138, %v1152
        %1155 = vset.pattern.permute.xlu0 11
        %1156 = vperm.xlu0 %1155, %v285
        %v1157 = vpop.permute.xlu0 %1156
        %v1159 = vlaneseq
        %v1160 = vshrl.u32 %v1159, 7
        %v1161 = vsub.s32 3, %v1160
        %v1162 = vrot.slane %v978, %v1161
        %v1163 = vlaneseq
        %v1164 = vshrl.u32 %v1163, 7
        %v1165 = vsub.s32 3, %v1164
        %v1166 = vrot.slane %v979, %v1165
        %v1167 = vmul.f32 %v1157, %v1162
        %v1168 = vmul.f32 %v1157, %v1166
        %v1169 = vadd.f32 %v1153, %v1167
        %v1170 = vadd.f32 %v1154, %v1168
        %1171 = vset.pattern.permute.xlu0 12
        %1172 = vperm.xlu0 %1171, %v285
        %v1173 = vpop.permute.xlu0 %1172
        %v1175 = vlaneseq
        %v1176 = vshrl.u32 %v1175, 7
        %v1177 = vsub.s32 4, %v1176
        %v1178 = vrot.slane %v978, %v1177
        %v1179 = vlaneseq
        %v1180 = vshrl.u32 %v1179, 7
        %v1181 = vsub.s32 4, %v1180
        %v1182 = vrot.slane %v979, %v1181
        %v1183 = vmul.f32 %v1173, %v1178
        %v1184 = vmul.f32 %v1173, %v1182
        %v1185 = vadd.f32 %v1169, %v1183
        %v1186 = vadd.f32 %v1170, %v1184
        %1187 = vset.pattern.permute.xlu0 13
        %1188 = vperm.xlu0 %1187, %v285
        %v1189 = vpop.permute.xlu0 %1188
        %v1191 = vlaneseq
        %v1192 = vshrl.u32 %v1191, 7
        %v1193 = vsub.s32 5, %v1192
        %v1194 = vrot.slane %v978, %v1193
        %v1195 = vlaneseq
        %v1196 = vshrl.u32 %v1195, 7
        %v1197 = vsub.s32 5, %v1196
        %v1198 = vrot.slane %v979, %v1197
        %v1199 = vmul.f32 %v1189, %v1194
        %v1200 = vmul.f32 %v1189, %v1198
        %v1201 = vadd.f32 %v1185, %v1199
        %v1202 = vadd.f32 %v1186, %v1200
        %1203 = vset.pattern.permute.xlu0 14
        %1204 = vperm.xlu0 %1203, %v285
        %v1205 = vpop.permute.xlu0 %1204
        %v1207 = vlaneseq
        %v1208 = vshrl.u32 %v1207, 7
        %v1209 = vsub.s32 6, %v1208
        %v1210 = vrot.slane %v978, %v1209
        %v1211 = vlaneseq
        %v1212 = vshrl.u32 %v1211, 7
        %v1213 = vsub.s32 6, %v1212
        %v1214 = vrot.slane %v979, %v1213
        %v1215 = vmul.f32 %v1205, %v1210
        %v1216 = vmul.f32 %v1205, %v1214
        %v1217 = vadd.f32 %v1201, %v1215
        %v1218 = vadd.f32 %v1202, %v1216
        %1219 = vset.pattern.permute.xlu0 15
        %1220 = vperm.xlu0 %1219, %v285
        %v1221 = vpop.permute.xlu0 %1220
        %v1223 = vlaneseq
        %v1224 = vshrl.u32 %v1223, 7
        %v1225 = vsub.s32 7, %v1224
        %v1226 = vrot.slane %v978, %v1225
        %v1227 = vlaneseq
        %v1228 = vshrl.u32 %v1227, 7
        %v1229 = vsub.s32 7, %v1228
        %v1230 = vrot.slane %v979, %v1229
        %v1231 = vmul.f32 %v1221, %v1226
        %v1232 = vmul.f32 %v1221, %v1230
        %v1233 = vadd.f32 %v1217, %v1231
        %v1234 = vadd.f32 %v1218, %v1232
        %1236 = vset.pattern.permute.xlu0 0
        %1237 = vperm.xlu0 %1236, %v286
        %v1238 = vpop.permute.xlu0 %1237
        %v1240 = vadd.f32 %v1233, %v1238
        %v1241 = vadd.f32 %v1234, %v1238
        %v1244 = vcombine.low %v1240, %v1241
        %1246 = vst [vmem:[%s271] sm:$0xff] %v1244
        %s1247 = sand.u32 %s181, 1
        %s1248 = scalar_lea.sflag [#allocation3], %s1247
        %s1249 = sand.u32 %s181, 1
        %s1250 = smul.addr %s1249, 8
        %s1251 = scalar_lea.vmem [#allocation2], %s1250
        // Predicated region
        $region49: #{tpu_custom_call.1} parent=47 // pred_check
          %p1252 = pneg %p191
        $region50: #{tpu_custom_call.1} parent=47 // pred_check_branch
          %1254 = sbr.rel (%p1252) target = $region52
        $region51: #{tpu_custom_call.1} parent=47 // pred_region
          %s1256 = ssub.s32 128, 128
          %1257 = vsyncadd %s1248, %s1256
          %s1258 = smul.addr %s21, 2
          %s1259 = smul.addr %s1258, 64
          %s1260 = scalar_lea.hbm %s7, %s1259
          %s1262 = sshll.u32 %s1251, 4
          %s1263 = int_to_ptr.vmem [resolvable:$true] %s1262
          %1265 = dma.vmem_to_hbm [thread:$0]  %s1263, 128, %s1260, %s1248
        $region52: #{tpu_custom_call.1} parent=47 // pred_fallthru
          _
      $region48: #{tpu_custom_call.1} parent=5 // pred_fallthru
        _
      %p1266 = scmp.le.s32.totalorder 2, %s16
      // Predicated region
      $region53: #{tpu_custom_call.1} parent=5 // pred_check
        %p1267 = pneg %p1266
      $region54: #{tpu_custom_call.1} parent=5 // pred_check_branch
        %1269 = sbr.rel (%p1267) target = $region56
      $region55: #{tpu_custom_call.1} parent=5 // pred_region
        %s1270 = ssub.s32 %s16, 2
        // Predicated region
        $region57: #{tpu_custom_call.1} parent=55 // pred_check
          %p1271 = pneg %p197
        $region58: #{tpu_custom_call.1} parent=55 // pred_check_branch
          %1273 = sbr.rel (%p1271) target = $region60
        $region59: #{tpu_custom_call.1} parent=55 // pred_region
          %s1274 = sand.u32 %s182, 1
          %s1275 = scalar_lea.sflag [#allocation3], %s1274
          %s1276 = sand.u32 %s182, 1
          %s1277 = smul.addr %s1276, 8
          %s1278 = scalar_lea.vmem [#allocation2], %s1277
          %1279 = dma.done %s1275, 128
        $region60: #{tpu_custom_call.1} parent=55 // pred_fallthru
          _
      $region56: #{tpu_custom_call.1} parent=5 // pred_fallthru
        _
    $region6: #{tpu_custom_call.1} parent=1 // loop_footer
      %s20 = sadd.s32 1, %s16
    $region7: #{tpu_custom_call.1} parent=1 // loop_footer_branch
      %15 = sbr.rel target = $region3
    $region8: #{tpu_custom_call.1} parent=1 // loop_exit
      _
    %1280 = vsyncpa [#allocation3], 1
    %s1281 = scalar_lea.sflag [#allocation3], 1
    %1282 = vsyncpa %s1281, 1

</llo_original>
